<compile_context>
chip_gen: v5e
topology: v5e:2x2
jax: 0.10.0
libtpu: 0.0.40
codegen_flags: <defaults>
</compile_context>

<pallas_src>
import functools

import jax
import jax.numpy as jnp
from jax.experimental import pallas as pl
from jax.experimental.pallas import tpu as pltpu


def _activation(y, act):
    """Activation on an f32 tile."""
    if act == "mish":
        # tanh(softplus(y)) == (t^2 - 1) / (t^2 + 1) with t = 1 + exp(y).
        t = 1.0 + jnp.exp(y)
        t2 = t * t
        rational = (t2 - 1.0) * pl.reciprocal(t2 + 1.0, approx=True)
        # Guard overflow of exp for large y (mish(y) ~ y there); where() selects
        # elementwise, so the NaN in the untaken branch is discarded.
        return jnp.where(y > 20.0, y, y * rational)
    if act == "relu":
        return jnp.maximum(y, 0.0)
    if act == "leaky":
        return jnp.where(y >= 0.0, y, 0.1 * y)  # module uses LeakyReLU(0.1)
    return y  # 'none'


def _sepconv_kernel(wd_ref, wp_ref, shift_ref, x_ref, o_ref, *,
                    cin, cout, kh, kw, oh, ow, stride, dilation, act):
    # wd_ref:    SMEM (Cin, KH*KW) f32   depthwise weights (scalars)
    # wp_ref:    SMEM (Cout, Cin)  f32   pointwise weights with BN scale folded
    # shift_ref: SMEM (Cout,)      f32   folded biases + BN shift
    # x_ref:     VMEM (1, Cin, H_pad, W_pad) bf16  padded input, one batch elem
    # o_ref:     VMEM (1, Cout, OH, OW)   f32      output (already NCHW order)

    # ---- depthwise conv: per channel, accumulate KH*KW shifted taps (VPU) ----
    dw = []
    for c in range(cin):
        xc = x_ref[0, c].astype(jnp.float32)            # (H_pad, W_pad)
        acc = None
        for ih in range(kh):
            for iw in range(kw):
                h0 = ih * dilation
                w0 = iw * dilation
                sl = xc[h0:h0 + (oh - 1) * stride + 1:stride,
                        w0:w0 + (ow - 1) * stride + 1:stride]   # (OH, OW)
                term = sl * wd_ref[c, ih * kw + iw]
                acc = term if acc is None else acc + term
        dw.append(acc)

    # ---- pointwise 1x1 conv + folded BN + activation -------------------------
    for co in range(cout):
        y = dw[0] * wp_ref[co, 0]
        for c in range(1, cin):
            y = y + dw[c] * wp_ref[co, c]
        y = y + shift_ref[co]
        y = _activation(y, act)
        o_ref[0, co] = y.astype(o_ref.dtype)


def separable_conv_bn_activation(
    x_nchw,        # (N, Cin, H, W)
    dw_weight,     # (Cin, 1, KH, KW)   depthwise conv weight (PyTorch layout)
    dw_bias,       # (Cin,)
    pw_weight,     # (Cout, Cin, 1, 1)  pointwise conv weight
    pw_bias,       # (Cout,)
    gamma,         # (Cout,) BN weight
    beta,          # (Cout,) BN bias
    running_mean,  # (Cout,)
    running_var,   # (Cout,)
    *,
    stride=1,
    padding=0,
    dilation=1,
    activation="none",
    eps=1e-5,
):
    N, Cin, H, W = x_nchw.shape
    Cout = pw_weight.shape[0]
    KH, KW = dw_weight.shape[2], dw_weight.shape[3]

    OH = (H + 2 * padding - dilation * (KH - 1) - 1) // stride + 1
    OW = (W + 2 * padding - dilation * (KW - 1) - 1) // stride + 1
    H_pad, W_pad = H + 2 * padding, W + 2 * padding

    # bf16 input stream (halves HBM read traffic); compute stays f32 in-kernel.
    x_pad = jnp.pad(
        x_nchw, ((0, 0), (0, 0), (padding, padding), (padding, padding))
    ).astype(jnp.bfloat16)

    # Fold everything linear into the pointwise weights / one shift vector:
    #   y = scale * (Wp @ (dwconv(x) + bd) + bp - mean) + beta
    #     = (scale*Wp) @ dwconv(x) + [scale*(Wp@bd + bp - mean) + beta]
    wd2 = dw_weight[:, 0, :, :].reshape(Cin, KH * KW).astype(jnp.float32)
    wp2 = pw_weight[:, :, 0, 0].astype(jnp.float32)              # (Cout, Cin)
    scale = (gamma / jnp.sqrt(running_var + eps)).astype(jnp.float32)
    wp_folded = wp2 * scale[:, None]                              # (Cout, Cin)
    shift = (scale * (wp2 @ dw_bias + pw_bias - running_mean) + beta
             ).astype(jnp.float32)                                # (Cout,)

    kernel = functools.partial(
        _sepconv_kernel,
        cin=Cin, cout=Cout, kh=KH, kw=KW, oh=OH, ow=OW,
        stride=stride, dilation=dilation, act=activation)

    out = pl.pallas_call(
        kernel,
        out_shape=jax.ShapeDtypeStruct((N, Cout, OH, OW), jnp.float32),
        grid_spec=pltpu.PrefetchScalarGridSpec(
            num_scalar_prefetch=0,
            grid=(N,),
            in_specs=[
                pl.BlockSpec(memory_space=pltpu.MemorySpace.SMEM),  # wd
                pl.BlockSpec(memory_space=pltpu.MemorySpace.SMEM),  # wp (folded)
                pl.BlockSpec(memory_space=pltpu.MemorySpace.SMEM),  # shift
                pl.BlockSpec((1, Cin, H_pad, W_pad), lambda n: (n, 0, 0, 0)),
            ],
            out_specs=pl.BlockSpec((1, Cout, OH, OW), lambda n: (n, 0, 0, 0)),
        ),
        compiler_params=pltpu.CompilerParams(
            dimension_semantics=("parallel",),     # N axis: both v7x TCs work
            vmem_limit_bytes=32 * 1024 * 1024,     # explicit; safe on v5e/v6e/v7x
        ),
    )(wd2, wp_folded, shift, x_pad)

    return out  # already NCHW: (N, Cout, OH, OW)


def _reference(x, dw_w, dw_b, pw_w, pw_b, gamma, beta, mean, var, *,
               stride, padding, dilation, eps, activation):
    """Pure-JAX reference of the PyTorch module forward (inference BN)."""
    dn = ("NCHW", "OIHW", "NCHW")
    cin = x.shape[1]
    y = jax.lax.conv_general_dilated(
        x, dw_w, window_strides=(stride, stride),
        padding=[(padding, padding), (padding, padding)],
        rhs_dilation=(dilation, dilation),
        dimension_numbers=dn, feature_group_count=cin)
    y = y + dw_b[None, :, None, None]
    y = jax.lax.conv_general_dilated(
        y, pw_w, window_strides=(1, 1), padding="VALID", dimension_numbers=dn)
    y = y + pw_b[None, :, None, None]
    inv = gamma / jnp.sqrt(var + eps)
    y = (y - mean[None, :, None, None]) * inv[None, :, None, None] \
        + beta[None, :, None, None]
    if activation == "mish":
        y = y * jnp.tanh(jax.nn.softplus(y))
    elif activation == "relu":
        y = jnp.maximum(y, 0.0)
    elif activation == "leaky":
        y = jnp.where(y >= 0.0, y, 0.1 * y)
    return y


if __name__ == "__main__":
    # Module config: SeparableConvBnActivation(in_channels=4, out_channels=8,
    #   kernel_size=3, stride=1, padding=1, bias=True, activation='mish')
    N, Cin, H, W = 2, 4, 16, 16
    Cout, K = 8, 3
    stride, padding, dilation = 1, 1, 1
    act = "mish"

    key = jax.random.PRNGKey(0)
    ks = jax.random.split(key, 9)
    x = jax.random.normal(ks[0], (N, Cin, H, W), dtype=jnp.float32)
    dw_w = 0.1 * jax.random.normal(ks[1], (Cin, 1, K, K), dtype=jnp.float32)
    dw_b = 0.1 * jax.random.normal(ks[2], (Cin,), dtype=jnp.float32)
    pw_w = 0.1 * jax.random.normal(ks[3], (Cout, Cin, 1, 1), dtype=jnp.float32)
    pw_b = 0.1 * jax.random.normal(ks[4], (Cout,), dtype=jnp.float32)
    gamma = 1.0 + 0.1 * jax.random.normal(ks[5], (Cout,), dtype=jnp.float32)
    beta = 0.1 * jax.random.normal(ks[6], (Cout,), dtype=jnp.float32)
    mean = 0.1 * jax.random.normal(ks[7], (Cout,), dtype=jnp.float32)
    var = 1.0 + 0.1 * jax.random.uniform(ks[8], (Cout,), dtype=jnp.float32)

    out = separable_conv_bn_activation(
        x, dw_w, dw_b, pw_w, pw_b, gamma, beta, mean, var,
        stride=stride, padding=padding, dilation=dilation, activation=act)
    out = jax.block_until_ready(out)
    assert out.shape == (N, Cout, H, W), out.shape
    assert jnp.all(jnp.isfinite(out))

    # Correctness check against a pure-JAX reference evaluated on the same
    # bf16-rounded input the kernel consumes.
    x_q = x.astype(jnp.bfloat16).astype(jnp.float32)
    ref = _reference(x_q, dw_w, dw_b, pw_w, pw_b, gamma, beta, mean, var,
                     stride=stride, padding=padding, dilation=dilation,
                     eps=1e-5, activation=act)
    assert jnp.allclose(out, ref, atol=1e-2, rtol=1e-2), \
        float(jnp.max(jnp.abs(out - ref)))
    print("KERNEL_OK")
</pallas_src>

<mosaic_0001>
module attributes {stable_mosaic.version = 11 : i64} {
  func.func @_sepconv_kernel(%arg0: i32, %arg1: memref<4x9xf32, #tpu.memory_space<smem>>, %arg2: memref<8x4xf32, #tpu.memory_space<smem>>, %arg3: memref<8xf32, #tpu.memory_space<smem>>, %arg4: memref<1x4x18x18xbf16, #tpu.memory_space<vmem>>, %arg5: memref<1x8x16x16xf32, #tpu.memory_space<vmem>>) attributes {dimension_semantics = [#tpu.dimension_semantics<parallel>], iteration_bounds = array<i64: 2>, scalar_prefetch = 0 : i64, scratch_operands = 0 : i64, tpu.core_type = #tpu.core_type<tc>, window_params = [{transform_indices = @transform_0, window_bounds = array<i64: 4, 9>}, {transform_indices = @transform_1, window_bounds = array<i64: 8, 4>}, {transform_indices = @transform_2, window_bounds = array<i64: 8>}, {transform_indices = @transform_3, window_bounds = array<i64: 1, 4, 18, 18>}, {transform_indices = @transform_4, window_bounds = array<i64: 1, 8, 16, 16>}]} {
    %c0 = arith.constant 0 : index
    %c0_0 = arith.constant 0 : index
    %c0_1 = arith.constant 0 : index
    %c0_2 = arith.constant 0 : index
    %0 = vector.load %arg4[%c0, %c0_0, %c0_1, %c0_2] : memref<1x4x18x18xbf16, #tpu.memory_space<vmem>>, vector<1x1x18x18xbf16>
    %1 = vector.shape_cast %0 : vector<1x1x18x18xbf16> to vector<18x18xbf16>
    %2 = arith.extf %1 : vector<18x18xbf16> to vector<18x18xf32>
    %3 = vector.extract_strided_slice %2 {offsets = [0, 0], sizes = [16, 16], strides = [1, 1]} : vector<18x18xf32> to vector<16x16xf32>
    %c0_3 = arith.constant 0 : index
    %c0_4 = arith.constant 0 : index
    %4 = memref.load %arg1[%c0_3, %c0_4] : memref<4x9xf32, #tpu.memory_space<smem>>
    %5 = vector.broadcast %4 : f32 to vector<16x16xf32>
    %6 = arith.mulf %3, %5 : vector<16x16xf32>
    %7 = vector.extract_strided_slice %2 {offsets = [0, 1], sizes = [16, 16], strides = [1, 1]} : vector<18x18xf32> to vector<16x16xf32>
    %c0_5 = arith.constant 0 : index
    %c1 = arith.constant 1 : index
    %8 = memref.load %arg1[%c0_5, %c1] : memref<4x9xf32, #tpu.memory_space<smem>>
    %9 = vector.broadcast %8 : f32 to vector<16x16xf32>
    %10 = arith.mulf %7, %9 : vector<16x16xf32>
    %11 = arith.addf %6, %10 : vector<16x16xf32>
    %12 = vector.extract_strided_slice %2 {offsets = [0, 2], sizes = [16, 16], strides = [1, 1]} : vector<18x18xf32> to vector<16x16xf32>
    %c0_6 = arith.constant 0 : index
    %c2 = arith.constant 2 : index
    %13 = memref.load %arg1[%c0_6, %c2] : memref<4x9xf32, #tpu.memory_space<smem>>
    %14 = vector.broadcast %13 : f32 to vector<16x16xf32>
    %15 = arith.mulf %12, %14 : vector<16x16xf32>
    %16 = arith.addf %11, %15 : vector<16x16xf32>
    %17 = vector.extract_strided_slice %2 {offsets = [1, 0], sizes = [16, 16], strides = [1, 1]} : vector<18x18xf32> to vector<16x16xf32>
    %c0_7 = arith.constant 0 : index
    %c3 = arith.constant 3 : index
    %18 = memref.load %arg1[%c0_7, %c3] : memref<4x9xf32, #tpu.memory_space<smem>>
    %19 = vector.broadcast %18 : f32 to vector<16x16xf32>
    %20 = arith.mulf %17, %19 : vector<16x16xf32>
    %21 = arith.addf %16, %20 : vector<16x16xf32>
    %22 = vector.extract_strided_slice %2 {offsets = [1, 1], sizes = [16, 16], strides = [1, 1]} : vector<18x18xf32> to vector<16x16xf32>
    %c0_8 = arith.constant 0 : index
    %c4 = arith.constant 4 : index
    %23 = memref.load %arg1[%c0_8, %c4] : memref<4x9xf32, #tpu.memory_space<smem>>
    %24 = vector.broadcast %23 : f32 to vector<16x16xf32>
    %25 = arith.mulf %22, %24 : vector<16x16xf32>
    %26 = arith.addf %21, %25 : vector<16x16xf32>
    %27 = vector.extract_strided_slice %2 {offsets = [1, 2], sizes = [16, 16], strides = [1, 1]} : vector<18x18xf32> to vector<16x16xf32>
    %c0_9 = arith.constant 0 : index
    %c5 = arith.constant 5 : index
    %28 = memref.load %arg1[%c0_9, %c5] : memref<4x9xf32, #tpu.memory_space<smem>>
    %29 = vector.broadcast %28 : f32 to vector<16x16xf32>
    %30 = arith.mulf %27, %29 : vector<16x16xf32>
    %31 = arith.addf %26, %30 : vector<16x16xf32>
    %32 = vector.extract_strided_slice %2 {offsets = [2, 0], sizes = [16, 16], strides = [1, 1]} : vector<18x18xf32> to vector<16x16xf32>
    %c0_10 = arith.constant 0 : index
    %c6 = arith.constant 6 : index
    %33 = memref.load %arg1[%c0_10, %c6] : memref<4x9xf32, #tpu.memory_space<smem>>
    %34 = vector.broadcast %33 : f32 to vector<16x16xf32>
    %35 = arith.mulf %32, %34 : vector<16x16xf32>
    %36 = arith.addf %31, %35 : vector<16x16xf32>
    %37 = vector.extract_strided_slice %2 {offsets = [2, 1], sizes = [16, 16], strides = [1, 1]} : vector<18x18xf32> to vector<16x16xf32>
    %c0_11 = arith.constant 0 : index
    %c7 = arith.constant 7 : index
    %38 = memref.load %arg1[%c0_11, %c7] : memref<4x9xf32, #tpu.memory_space<smem>>
    %39 = vector.broadcast %38 : f32 to vector<16x16xf32>
    %40 = arith.mulf %37, %39 : vector<16x16xf32>
    %41 = arith.addf %36, %40 : vector<16x16xf32>
    %42 = vector.extract_strided_slice %2 {offsets = [2, 2], sizes = [16, 16], strides = [1, 1]} : vector<18x18xf32> to vector<16x16xf32>
    %c0_12 = arith.constant 0 : index
    %c8 = arith.constant 8 : index
    %43 = memref.load %arg1[%c0_12, %c8] : memref<4x9xf32, #tpu.memory_space<smem>>
    %44 = vector.broadcast %43 : f32 to vector<16x16xf32>
    %45 = arith.mulf %42, %44 : vector<16x16xf32>
    %46 = arith.addf %41, %45 : vector<16x16xf32>
    %c0_13 = arith.constant 0 : index
    %c1_14 = arith.constant 1 : index
    %c0_15 = arith.constant 0 : index
    %c0_16 = arith.constant 0 : index
    %47 = vector.load %arg4[%c0_13, %c1_14, %c0_15, %c0_16] : memref<1x4x18x18xbf16, #tpu.memory_space<vmem>>, vector<1x1x18x18xbf16>
    %48 = vector.shape_cast %47 : vector<1x1x18x18xbf16> to vector<18x18xbf16>
    %49 = arith.extf %48 : vector<18x18xbf16> to vector<18x18xf32>
    %50 = vector.extract_strided_slice %49 {offsets = [0, 0], sizes = [16, 16], strides = [1, 1]} : vector<18x18xf32> to vector<16x16xf32>
    %c1_17 = arith.constant 1 : index
    %c0_18 = arith.constant 0 : index
    %51 = memref.load %arg1[%c1_17, %c0_18] : memref<4x9xf32, #tpu.memory_space<smem>>
    %52 = vector.broadcast %51 : f32 to vector<16x16xf32>
    %53 = arith.mulf %50, %52 : vector<16x16xf32>
    %54 = vector.extract_strided_slice %49 {offsets = [0, 1], sizes = [16, 16], strides = [1, 1]} : vector<18x18xf32> to vector<16x16xf32>
    %c1_19 = arith.constant 1 : index
    %c1_20 = arith.constant 1 : index
    %55 = memref.load %arg1[%c1_19, %c1_20] : memref<4x9xf32, #tpu.memory_space<smem>>
    %56 = vector.broadcast %55 : f32 to vector<16x16xf32>
    %57 = arith.mulf %54, %56 : vector<16x16xf32>
    %58 = arith.addf %53, %57 : vector<16x16xf32>
    %59 = vector.extract_strided_slice %49 {offsets = [0, 2], sizes = [16, 16], strides = [1, 1]} : vector<18x18xf32> to vector<16x16xf32>
    %c1_21 = arith.constant 1 : index
    %c2_22 = arith.constant 2 : index
    %60 = memref.load %arg1[%c1_21, %c2_22] : memref<4x9xf32, #tpu.memory_space<smem>>
    %61 = vector.broadcast %60 : f32 to vector<16x16xf32>
    %62 = arith.mulf %59, %61 : vector<16x16xf32>
    %63 = arith.addf %58, %62 : vector<16x16xf32>
    %64 = vector.extract_strided_slice %49 {offsets = [1, 0], sizes = [16, 16], strides = [1, 1]} : vector<18x18xf32> to vector<16x16xf32>
    %c1_23 = arith.constant 1 : index
    %c3_24 = arith.constant 3 : index
    %65 = memref.load %arg1[%c1_23, %c3_24] : memref<4x9xf32, #tpu.memory_space<smem>>
    %66 = vector.broadcast %65 : f32 to vector<16x16xf32>
    %67 = arith.mulf %64, %66 : vector<16x16xf32>
    %68 = arith.addf %63, %67 : vector<16x16xf32>
    %69 = vector.extract_strided_slice %49 {offsets = [1, 1], sizes = [16, 16], strides = [1, 1]} : vector<18x18xf32> to vector<16x16xf32>
    %c1_25 = arith.constant 1 : index
    %c4_26 = arith.constant 4 : index
    %70 = memref.load %arg1[%c1_25, %c4_26] : memref<4x9xf32, #tpu.memory_space<smem>>
    %71 = vector.broadcast %70 : f32 to vector<16x16xf32>
    %72 = arith.mulf %69, %71 : vector<16x16xf32>
    %73 = arith.addf %68, %72 : vector<16x16xf32>
    %74 = vector.extract_strided_slice %49 {offsets = [1, 2], sizes = [16, 16], strides = [1, 1]} : vector<18x18xf32> to vector<16x16xf32>
    %c1_27 = arith.constant 1 : index
    %c5_28 = arith.constant 5 : index
    %75 = memref.load %arg1[%c1_27, %c5_28] : memref<4x9xf32, #tpu.memory_space<smem>>
    %76 = vector.broadcast %75 : f32 to vector<16x16xf32>
    %77 = arith.mulf %74, %76 : vector<16x16xf32>
    %78 = arith.addf %73, %77 : vector<16x16xf32>
    %79 = vector.extract_strided_slice %49 {offsets = [2, 0], sizes = [16, 16], strides = [1, 1]} : vector<18x18xf32> to vector<16x16xf32>
    %c1_29 = arith.constant 1 : index
    %c6_30 = arith.constant 6 : index
    %80 = memref.load %arg1[%c1_29, %c6_30] : memref<4x9xf32, #tpu.memory_space<smem>>
    %81 = vector.broadcast %80 : f32 to vector<16x16xf32>
    %82 = arith.mulf %79, %81 : vector<16x16xf32>
    %83 = arith.addf %78, %82 : vector<16x16xf32>
    %84 = vector.extract_strided_slice %49 {offsets = [2, 1], sizes = [16, 16], strides = [1, 1]} : vector<18x18xf32> to vector<16x16xf32>
    %c1_31 = arith.constant 1 : index
    %c7_32 = arith.constant 7 : index
    %85 = memref.load %arg1[%c1_31, %c7_32] : memref<4x9xf32, #tpu.memory_space<smem>>
    %86 = vector.broadcast %85 : f32 to vector<16x16xf32>
    %87 = arith.mulf %84, %86 : vector<16x16xf32>
    %88 = arith.addf %83, %87 : vector<16x16xf32>
    %89 = vector.extract_strided_slice %49 {offsets = [2, 2], sizes = [16, 16], strides = [1, 1]} : vector<18x18xf32> to vector<16x16xf32>
    %c1_33 = arith.constant 1 : index
    %c8_34 = arith.constant 8 : index
    %90 = memref.load %arg1[%c1_33, %c8_34] : memref<4x9xf32, #tpu.memory_space<smem>>
    %91 = vector.broadcast %90 : f32 to vector<16x16xf32>
    %92 = arith.mulf %89, %91 : vector<16x16xf32>
    %93 = arith.addf %88, %92 : vector<16x16xf32>
    %c0_35 = arith.constant 0 : index
    %c2_36 = arith.constant 2 : index
    %c0_37 = arith.constant 0 : index
    %c0_38 = arith.constant 0 : index
    %94 = vector.load %arg4[%c0_35, %c2_36, %c0_37, %c0_38] : memref<1x4x18x18xbf16, #tpu.memory_space<vmem>>, vector<1x1x18x18xbf16>
    %95 = vector.shape_cast %94 : vector<1x1x18x18xbf16> to vector<18x18xbf16>
    %96 = arith.extf %95 : vector<18x18xbf16> to vector<18x18xf32>
    %97 = vector.extract_strided_slice %96 {offsets = [0, 0], sizes = [16, 16], strides = [1, 1]} : vector<18x18xf32> to vector<16x16xf32>
    %c2_39 = arith.constant 2 : index
    %c0_40 = arith.constant 0 : index
    %98 = memref.load %arg1[%c2_39, %c0_40] : memref<4x9xf32, #tpu.memory_space<smem>>
    %99 = vector.broadcast %98 : f32 to vector<16x16xf32>
    %100 = arith.mulf %97, %99 : vector<16x16xf32>
    %101 = vector.extract_strided_slice %96 {offsets = [0, 1], sizes = [16, 16], strides = [1, 1]} : vector<18x18xf32> to vector<16x16xf32>
    %c2_41 = arith.constant 2 : index
    %c1_42 = arith.constant 1 : index
    %102 = memref.load %arg1[%c2_41, %c1_42] : memref<4x9xf32, #tpu.memory_space<smem>>
    %103 = vector.broadcast %102 : f32 to vector<16x16xf32>
    %104 = arith.mulf %101, %103 : vector<16x16xf32>
    %105 = arith.addf %100, %104 : vector<16x16xf32>
    %106 = vector.extract_strided_slice %96 {offsets = [0, 2], sizes = [16, 16], strides = [1, 1]} : vector<18x18xf32> to vector<16x16xf32>
    %c2_43 = arith.constant 2 : index
    %c2_44 = arith.constant 2 : index
    %107 = memref.load %arg1[%c2_43, %c2_44] : memref<4x9xf32, #tpu.memory_space<smem>>
    %108 = vector.broadcast %107 : f32 to vector<16x16xf32>
    %109 = arith.mulf %106, %108 : vector<16x16xf32>
    %110 = arith.addf %105, %109 : vector<16x16xf32>
    %111 = vector.extract_strided_slice %96 {offsets = [1, 0], sizes = [16, 16], strides = [1, 1]} : vector<18x18xf32> to vector<16x16xf32>
    %c2_45 = arith.constant 2 : index
    %c3_46 = arith.constant 3 : index
    %112 = memref.load %arg1[%c2_45, %c3_46] : memref<4x9xf32, #tpu.memory_space<smem>>
    %113 = vector.broadcast %112 : f32 to vector<16x16xf32>
    %114 = arith.mulf %111, %113 : vector<16x16xf32>
    %115 = arith.addf %110, %114 : vector<16x16xf32>
    %116 = vector.extract_strided_slice %96 {offsets = [1, 1], sizes = [16, 16], strides = [1, 1]} : vector<18x18xf32> to vector<16x16xf32>
    %c2_47 = arith.constant 2 : index
    %c4_48 = arith.constant 4 : index
    %117 = memref.load %arg1[%c2_47, %c4_48] : memref<4x9xf32, #tpu.memory_space<smem>>
    %118 = vector.broadcast %117 : f32 to vector<16x16xf32>
    %119 = arith.mulf %116, %118 : vector<16x16xf32>
    %120 = arith.addf %115, %119 : vector<16x16xf32>
    %121 = vector.extract_strided_slice %96 {offsets = [1, 2], sizes = [16, 16], strides = [1, 1]} : vector<18x18xf32> to vector<16x16xf32>
    %c2_49 = arith.constant 2 : index
    %c5_50 = arith.constant 5 : index
    %122 = memref.load %arg1[%c2_49, %c5_50] : memref<4x9xf32, #tpu.memory_space<smem>>
    %123 = vector.broadcast %122 : f32 to vector<16x16xf32>
    %124 = arith.mulf %121, %123 : vector<16x16xf32>
    %125 = arith.addf %120, %124 : vector<16x16xf32>
    %126 = vector.extract_strided_slice %96 {offsets = [2, 0], sizes = [16, 16], strides = [1, 1]} : vector<18x18xf32> to vector<16x16xf32>
    %c2_51 = arith.constant 2 : index
    %c6_52 = arith.constant 6 : index
    %127 = memref.load %arg1[%c2_51, %c6_52] : memref<4x9xf32, #tpu.memory_space<smem>>
    %128 = vector.broadcast %127 : f32 to vector<16x16xf32>
    %129 = arith.mulf %126, %128 : vector<16x16xf32>
    %130 = arith.addf %125, %129 : vector<16x16xf32>
    %131 = vector.extract_strided_slice %96 {offsets = [2, 1], sizes = [16, 16], strides = [1, 1]} : vector<18x18xf32> to vector<16x16xf32>
    %c2_53 = arith.constant 2 : index
    %c7_54 = arith.constant 7 : index
    %132 = memref.load %arg1[%c2_53, %c7_54] : memref<4x9xf32, #tpu.memory_space<smem>>
    %133 = vector.broadcast %132 : f32 to vector<16x16xf32>
    %134 = arith.mulf %131, %133 : vector<16x16xf32>
    %135 = arith.addf %130, %134 : vector<16x16xf32>
    %136 = vector.extract_strided_slice %96 {offsets = [2, 2], sizes = [16, 16], strides = [1, 1]} : vector<18x18xf32> to vector<16x16xf32>
    %c2_55 = arith.constant 2 : index
    %c8_56 = arith.constant 8 : index
    %137 = memref.load %arg1[%c2_55, %c8_56] : memref<4x9xf32, #tpu.memory_space<smem>>
    %138 = vector.broadcast %137 : f32 to vector<16x16xf32>
    %139 = arith.mulf %136, %138 : vector<16x16xf32>
    %140 = arith.addf %135, %139 : vector<16x16xf32>
    %c0_57 = arith.constant 0 : index
    %c3_58 = arith.constant 3 : index
    %c0_59 = arith.constant 0 : index
    %c0_60 = arith.constant 0 : index
    %141 = vector.load %arg4[%c0_57, %c3_58, %c0_59, %c0_60] : memref<1x4x18x18xbf16, #tpu.memory_space<vmem>>, vector<1x1x18x18xbf16>
    %142 = vector.shape_cast %141 : vector<1x1x18x18xbf16> to vector<18x18xbf16>
    %143 = arith.extf %142 : vector<18x18xbf16> to vector<18x18xf32>
    %144 = vector.extract_strided_slice %143 {offsets = [0, 0], sizes = [16, 16], strides = [1, 1]} : vector<18x18xf32> to vector<16x16xf32>
    %c3_61 = arith.constant 3 : index
    %c0_62 = arith.constant 0 : index
    %145 = memref.load %arg1[%c3_61, %c0_62] : memref<4x9xf32, #tpu.memory_space<smem>>
    %146 = vector.broadcast %145 : f32 to vector<16x16xf32>
    %147 = arith.mulf %144, %146 : vector<16x16xf32>
    %148 = vector.extract_strided_slice %143 {offsets = [0, 1], sizes = [16, 16], strides = [1, 1]} : vector<18x18xf32> to vector<16x16xf32>
    %c3_63 = arith.constant 3 : index
    %c1_64 = arith.constant 1 : index
    %149 = memref.load %arg1[%c3_63, %c1_64] : memref<4x9xf32, #tpu.memory_space<smem>>
    %150 = vector.broadcast %149 : f32 to vector<16x16xf32>
    %151 = arith.mulf %148, %150 : vector<16x16xf32>
    %152 = arith.addf %147, %151 : vector<16x16xf32>
    %153 = vector.extract_strided_slice %143 {offsets = [0, 2], sizes = [16, 16], strides = [1, 1]} : vector<18x18xf32> to vector<16x16xf32>
    %c3_65 = arith.constant 3 : index
    %c2_66 = arith.constant 2 : index
    %154 = memref.load %arg1[%c3_65, %c2_66] : memref<4x9xf32, #tpu.memory_space<smem>>
    %155 = vector.broadcast %154 : f32 to vector<16x16xf32>
    %156 = arith.mulf %153, %155 : vector<16x16xf32>
    %157 = arith.addf %152, %156 : vector<16x16xf32>
    %158 = vector.extract_strided_slice %143 {offsets = [1, 0], sizes = [16, 16], strides = [1, 1]} : vector<18x18xf32> to vector<16x16xf32>
    %c3_67 = arith.constant 3 : index
    %c3_68 = arith.constant 3 : index
    %159 = memref.load %arg1[%c3_67, %c3_68] : memref<4x9xf32, #tpu.memory_space<smem>>
    %160 = vector.broadcast %159 : f32 to vector<16x16xf32>
    %161 = arith.mulf %158, %160 : vector<16x16xf32>
    %162 = arith.addf %157, %161 : vector<16x16xf32>
    %163 = vector.extract_strided_slice %143 {offsets = [1, 1], sizes = [16, 16], strides = [1, 1]} : vector<18x18xf32> to vector<16x16xf32>
    %c3_69 = arith.constant 3 : index
    %c4_70 = arith.constant 4 : index
    %164 = memref.load %arg1[%c3_69, %c4_70] : memref<4x9xf32, #tpu.memory_space<smem>>
    %165 = vector.broadcast %164 : f32 to vector<16x16xf32>
    %166 = arith.mulf %163, %165 : vector<16x16xf32>
    %167 = arith.addf %162, %166 : vector<16x16xf32>
    %168 = vector.extract_strided_slice %143 {offsets = [1, 2], sizes = [16, 16], strides = [1, 1]} : vector<18x18xf32> to vector<16x16xf32>
    %c3_71 = arith.constant 3 : index
    %c5_72 = arith.constant 5 : index
    %169 = memref.load %arg1[%c3_71, %c5_72] : memref<4x9xf32, #tpu.memory_space<smem>>
    %170 = vector.broadcast %169 : f32 to vector<16x16xf32>
    %171 = arith.mulf %168, %170 : vector<16x16xf32>
    %172 = arith.addf %167, %171 : vector<16x16xf32>
    %173 = vector.extract_strided_slice %143 {offsets = [2, 0], sizes = [16, 16], strides = [1, 1]} : vector<18x18xf32> to vector<16x16xf32>
    %c3_73 = arith.constant 3 : index
    %c6_74 = arith.constant 6 : index
    %174 = memref.load %arg1[%c3_73, %c6_74] : memref<4x9xf32, #tpu.memory_space<smem>>
    %175 = vector.broadcast %174 : f32 to vector<16x16xf32>
    %176 = arith.mulf %173, %175 : vector<16x16xf32>
    %177 = arith.addf %172, %176 : vector<16x16xf32>
    %178 = vector.extract_strided_slice %143 {offsets = [2, 1], sizes = [16, 16], strides = [1, 1]} : vector<18x18xf32> to vector<16x16xf32>
    %c3_75 = arith.constant 3 : index
    %c7_76 = arith.constant 7 : index
    %179 = memref.load %arg1[%c3_75, %c7_76] : memref<4x9xf32, #tpu.memory_space<smem>>
    %180 = vector.broadcast %179 : f32 to vector<16x16xf32>
    %181 = arith.mulf %178, %180 : vector<16x16xf32>
    %182 = arith.addf %177, %181 : vector<16x16xf32>
    %183 = vector.extract_strided_slice %143 {offsets = [2, 2], sizes = [16, 16], strides = [1, 1]} : vector<18x18xf32> to vector<16x16xf32>
    %c3_77 = arith.constant 3 : index
    %c8_78 = arith.constant 8 : index
    %184 = memref.load %arg1[%c3_77, %c8_78] : memref<4x9xf32, #tpu.memory_space<smem>>
    %185 = vector.broadcast %184 : f32 to vector<16x16xf32>
    %186 = arith.mulf %183, %185 : vector<16x16xf32>
    %187 = arith.addf %182, %186 : vector<16x16xf32>
    %c0_79 = arith.constant 0 : index
    %c0_80 = arith.constant 0 : index
    %188 = memref.load %arg2[%c0_79, %c0_80] : memref<8x4xf32, #tpu.memory_space<smem>>
    %189 = vector.broadcast %188 : f32 to vector<16x16xf32>
    %190 = arith.mulf %46, %189 : vector<16x16xf32>
    %c0_81 = arith.constant 0 : index
    %c1_82 = arith.constant 1 : index
    %191 = memref.load %arg2[%c0_81, %c1_82] : memref<8x4xf32, #tpu.memory_space<smem>>
    %192 = vector.broadcast %191 : f32 to vector<16x16xf32>
    %193 = arith.mulf %93, %192 : vector<16x16xf32>
    %194 = arith.addf %190, %193 : vector<16x16xf32>
    %c0_83 = arith.constant 0 : index
    %c2_84 = arith.constant 2 : index
    %195 = memref.load %arg2[%c0_83, %c2_84] : memref<8x4xf32, #tpu.memory_space<smem>>
    %196 = vector.broadcast %195 : f32 to vector<16x16xf32>
    %197 = arith.mulf %140, %196 : vector<16x16xf32>
    %198 = arith.addf %194, %197 : vector<16x16xf32>
    %c0_85 = arith.constant 0 : index
    %c3_86 = arith.constant 3 : index
    %199 = memref.load %arg2[%c0_85, %c3_86] : memref<8x4xf32, #tpu.memory_space<smem>>
    %200 = vector.broadcast %199 : f32 to vector<16x16xf32>
    %201 = arith.mulf %187, %200 : vector<16x16xf32>
    %202 = arith.addf %198, %201 : vector<16x16xf32>
    %c0_87 = arith.constant 0 : index
    %203 = memref.load %arg3[%c0_87] : memref<8xf32, #tpu.memory_space<smem>>
    %204 = vector.broadcast %203 : f32 to vector<16x16xf32>
    %205 = arith.addf %202, %204 : vector<16x16xf32>
    %206 = math.exp %205 : vector<16x16xf32>
    %cst = arith.constant 1.000000e+00 : f32
    %207 = vector.broadcast %cst : f32 to vector<16x16xf32>
    %208 = arith.addf %207, %206 : vector<16x16xf32>
    %209 = arith.mulf %208, %208 : vector<16x16xf32>
    %cst_88 = arith.constant 1.000000e+00 : f32
    %210 = vector.broadcast %cst_88 : f32 to vector<16x16xf32>
    %211 = arith.subf %209, %210 : vector<16x16xf32>
    %cst_89 = arith.constant 1.000000e+00 : f32
    %212 = vector.broadcast %cst_89 : f32 to vector<16x16xf32>
    %213 = arith.addf %209, %212 : vector<16x16xf32>
    %214 = tpu.reciprocal %213 {approx = true} : vector<16x16xf32> -> vector<16x16xf32>
    %215 = arith.mulf %211, %214 : vector<16x16xf32>
    %cst_90 = arith.constant 2.000000e+01 : f32
    %216 = vector.broadcast %cst_90 : f32 to vector<16x16xf32>
    %217 = arith.cmpf ogt, %205, %216 : vector<16x16xf32>
    %218 = arith.mulf %205, %215 : vector<16x16xf32>
    %219 = arith.select %217, %205, %218 : vector<16x16xi1>, vector<16x16xf32>
    %c0_91 = arith.constant 0 : index
    %c0_92 = arith.constant 0 : index
    %c0_93 = arith.constant 0 : index
    %c0_94 = arith.constant 0 : index
    %220 = vector.load %arg5[%c0_91, %c0_92, %c0_93, %c0_94] : memref<1x8x16x16xf32, #tpu.memory_space<vmem>>, vector<1x1x16x16xf32>
    %221 = vector.shape_cast %220 : vector<1x1x16x16xf32> to vector<16x16xf32>
    %222 = vector.shape_cast %219 : vector<16x16xf32> to vector<1x1x16x16xf32>
    tpu.vector_store %arg5[%c0_91, %c0_92, %c0_93, %c0_94], %222 {strides = array<i32>} : memref<1x8x16x16xf32, #tpu.memory_space<vmem>>, vector<1x1x16x16xf32>,
    %c1_95 = arith.constant 1 : index
    %c0_96 = arith.constant 0 : index
    %223 = memref.load %arg2[%c1_95, %c0_96] : memref<8x4xf32, #tpu.memory_space<smem>>
    %224 = vector.broadcast %223 : f32 to vector<16x16xf32>
    %225 = arith.mulf %46, %224 : vector<16x16xf32>
    %c1_97 = arith.constant 1 : index
    %c1_98 = arith.constant 1 : index
    %226 = memref.load %arg2[%c1_97, %c1_98] : memref<8x4xf32, #tpu.memory_space<smem>>
    %227 = vector.broadcast %226 : f32 to vector<16x16xf32>
    %228 = arith.mulf %93, %227 : vector<16x16xf32>
    %229 = arith.addf %225, %228 : vector<16x16xf32>
    %c1_99 = arith.constant 1 : index
    %c2_100 = arith.constant 2 : index
    %230 = memref.load %arg2[%c1_99, %c2_100] : memref<8x4xf32, #tpu.memory_space<smem>>
    %231 = vector.broadcast %230 : f32 to vector<16x16xf32>
    %232 = arith.mulf %140, %231 : vector<16x16xf32>
    %233 = arith.addf %229, %232 : vector<16x16xf32>
    %c1_101 = arith.constant 1 : index
    %c3_102 = arith.constant 3 : index
    %234 = memref.load %arg2[%c1_101, %c3_102] : memref<8x4xf32, #tpu.memory_space<smem>>
    %235 = vector.broadcast %234 : f32 to vector<16x16xf32>
    %236 = arith.mulf %187, %235 : vector<16x16xf32>
    %237 = arith.addf %233, %236 : vector<16x16xf32>
    %c1_103 = arith.constant 1 : index
    %238 = memref.load %arg3[%c1_103] : memref<8xf32, #tpu.memory_space<smem>>
    %239 = vector.broadcast %238 : f32 to vector<16x16xf32>
    %240 = arith.addf %237, %239 : vector<16x16xf32>
    %241 = math.exp %240 : vector<16x16xf32>
    %cst_104 = arith.constant 1.000000e+00 : f32
    %242 = vector.broadcast %cst_104 : f32 to vector<16x16xf32>
    %243 = arith.addf %242, %241 : vector<16x16xf32>
    %244 = arith.mulf %243, %243 : vector<16x16xf32>
    %cst_105 = arith.constant 1.000000e+00 : f32
    %245 = vector.broadcast %cst_105 : f32 to vector<16x16xf32>
    %246 = arith.subf %244, %245 : vector<16x16xf32>
    %cst_106 = arith.constant 1.000000e+00 : f32
    %247 = vector.broadcast %cst_106 : f32 to vector<16x16xf32>
    %248 = arith.addf %244, %247 : vector<16x16xf32>
    %249 = tpu.reciprocal %248 {approx = true} : vector<16x16xf32> -> vector<16x16xf32>
    %250 = arith.mulf %246, %249 : vector<16x16xf32>
    %cst_107 = arith.constant 2.000000e+01 : f32
    %251 = vector.broadcast %cst_107 : f32 to vector<16x16xf32>
    %252 = arith.cmpf ogt, %240, %251 : vector<16x16xf32>
    %253 = arith.mulf %240, %250 : vector<16x16xf32>
    %254 = arith.select %252, %240, %253 : vector<16x16xi1>, vector<16x16xf32>
    %c0_108 = arith.constant 0 : index
    %c1_109 = arith.constant 1 : index
    %c0_110 = arith.constant 0 : index
    %c0_111 = arith.constant 0 : index
    %255 = vector.load %arg5[%c0_108, %c1_109, %c0_110, %c0_111] : memref<1x8x16x16xf32, #tpu.memory_space<vmem>>, vector<1x1x16x16xf32>
    %256 = vector.shape_cast %255 : vector<1x1x16x16xf32> to vector<16x16xf32>
    %257 = vector.shape_cast %254 : vector<16x16xf32> to vector<1x1x16x16xf32>
    tpu.vector_store %arg5[%c0_108, %c1_109, %c0_110, %c0_111], %257 {strides = array<i32>} : memref<1x8x16x16xf32, #tpu.memory_space<vmem>>, vector<1x1x16x16xf32>,
    %c2_112 = arith.constant 2 : index
    %c0_113 = arith.constant 0 : index
    %258 = memref.load %arg2[%c2_112, %c0_113] : memref<8x4xf32, #tpu.memory_space<smem>>
    %259 = vector.broadcast %258 : f32 to vector<16x16xf32>
    %260 = arith.mulf %46, %259 : vector<16x16xf32>
    %c2_114 = arith.constant 2 : index
    %c1_115 = arith.constant 1 : index
    %261 = memref.load %arg2[%c2_114, %c1_115] : memref<8x4xf32, #tpu.memory_space<smem>>
    %262 = vector.broadcast %261 : f32 to vector<16x16xf32>
    %263 = arith.mulf %93, %262 : vector<16x16xf32>
    %264 = arith.addf %260, %263 : vector<16x16xf32>
    %c2_116 = arith.constant 2 : index
    %c2_117 = arith.constant 2 : index
    %265 = memref.load %arg2[%c2_116, %c2_117] : memref<8x4xf32, #tpu.memory_space<smem>>
    %266 = vector.broadcast %265 : f32 to vector<16x16xf32>
    %267 = arith.mulf %140, %266 : vector<16x16xf32>
    %268 = arith.addf %264, %267 : vector<16x16xf32>
    %c2_118 = arith.constant 2 : index
    %c3_119 = arith.constant 3 : index
    %269 = memref.load %arg2[%c2_118, %c3_119] : memref<8x4xf32, #tpu.memory_space<smem>>
    %270 = vector.broadcast %269 : f32 to vector<16x16xf32>
    %271 = arith.mulf %187, %270 : vector<16x16xf32>
    %272 = arith.addf %268, %271 : vector<16x16xf32>
    %c2_120 = arith.constant 2 : index
    %273 = memref.load %arg3[%c2_120] : memref<8xf32, #tpu.memory_space<smem>>
    %274 = vector.broadcast %273 : f32 to vector<16x16xf32>
    %275 = arith.addf %272, %274 : vector<16x16xf32>
    %276 = math.exp %275 : vector<16x16xf32>
    %cst_121 = arith.constant 1.000000e+00 : f32
    %277 = vector.broadcast %cst_121 : f32 to vector<16x16xf32>
    %278 = arith.addf %277, %276 : vector<16x16xf32>
    %279 = arith.mulf %278, %278 : vector<16x16xf32>
    %cst_122 = arith.constant 1.000000e+00 : f32
    %280 = vector.broadcast %cst_122 : f32 to vector<16x16xf32>
    %281 = arith.subf %279, %280 : vector<16x16xf32>
    %cst_123 = arith.constant 1.000000e+00 : f32
    %282 = vector.broadcast %cst_123 : f32 to vector<16x16xf32>
    %283 = arith.addf %279, %282 : vector<16x16xf32>
    %284 = tpu.reciprocal %283 {approx = true} : vector<16x16xf32> -> vector<16x16xf32>
    %285 = arith.mulf %281, %284 : vector<16x16xf32>
    %cst_124 = arith.constant 2.000000e+01 : f32
    %286 = vector.broadcast %cst_124 : f32 to vector<16x16xf32>
    %287 = arith.cmpf ogt, %275, %286 : vector<16x16xf32>
    %288 = arith.mulf %275, %285 : vector<16x16xf32>
    %289 = arith.select %287, %275, %288 : vector<16x16xi1>, vector<16x16xf32>
    %c0_125 = arith.constant 0 : index
    %c2_126 = arith.constant 2 : index
    %c0_127 = arith.constant 0 : index
    %c0_128 = arith.constant 0 : index
    %290 = vector.load %arg5[%c0_125, %c2_126, %c0_127, %c0_128] : memref<1x8x16x16xf32, #tpu.memory_space<vmem>>, vector<1x1x16x16xf32>
    %291 = vector.shape_cast %290 : vector<1x1x16x16xf32> to vector<16x16xf32>
    %292 = vector.shape_cast %289 : vector<16x16xf32> to vector<1x1x16x16xf32>
    tpu.vector_store %arg5[%c0_125, %c2_126, %c0_127, %c0_128], %292 {strides = array<i32>} : memref<1x8x16x16xf32, #tpu.memory_space<vmem>>, vector<1x1x16x16xf32>,
    %c3_129 = arith.constant 3 : index
    %c0_130 = arith.constant 0 : index
    %293 = memref.load %arg2[%c3_129, %c0_130] : memref<8x4xf32, #tpu.memory_space<smem>>
    %294 = vector.broadcast %293 : f32 to vector<16x16xf32>
    %295 = arith.mulf %46, %294 : vector<16x16xf32>
    %c3_131 = arith.constant 3 : index
    %c1_132 = arith.constant 1 : index
    %296 = memref.load %arg2[%c3_131, %c1_132] : memref<8x4xf32, #tpu.memory_space<smem>>
    %297 = vector.broadcast %296 : f32 to vector<16x16xf32>
    %298 = arith.mulf %93, %297 : vector<16x16xf32>
    %299 = arith.addf %295, %298 : vector<16x16xf32>
    %c3_133 = arith.constant 3 : index
    %c2_134 = arith.constant 2 : index
    %300 = memref.load %arg2[%c3_133, %c2_134] : memref<8x4xf32, #tpu.memory_space<smem>>
    %301 = vector.broadcast %300 : f32 to vector<16x16xf32>
    %302 = arith.mulf %140, %301 : vector<16x16xf32>
    %303 = arith.addf %299, %302 : vector<16x16xf32>
    %c3_135 = arith.constant 3 : index
    %c3_136 = arith.constant 3 : index
    %304 = memref.load %arg2[%c3_135, %c3_136] : memref<8x4xf32, #tpu.memory_space<smem>>
    %305 = vector.broadcast %304 : f32 to vector<16x16xf32>
    %306 = arith.mulf %187, %305 : vector<16x16xf32>
    %307 = arith.addf %303, %306 : vector<16x16xf32>
    %c3_137 = arith.constant 3 : index
    %308 = memref.load %arg3[%c3_137] : memref<8xf32, #tpu.memory_space<smem>>
    %309 = vector.broadcast %308 : f32 to vector<16x16xf32>
    %310 = arith.addf %307, %309 : vector<16x16xf32>
    %311 = math.exp %310 : vector<16x16xf32>
    %cst_138 = arith.constant 1.000000e+00 : f32
    %312 = vector.broadcast %cst_138 : f32 to vector<16x16xf32>
    %313 = arith.addf %312, %311 : vector<16x16xf32>
    %314 = arith.mulf %313, %313 : vector<16x16xf32>
    %cst_139 = arith.constant 1.000000e+00 : f32
    %315 = vector.broadcast %cst_139 : f32 to vector<16x16xf32>
    %316 = arith.subf %314, %315 : vector<16x16xf32>
    %cst_140 = arith.constant 1.000000e+00 : f32
    %317 = vector.broadcast %cst_140 : f32 to vector<16x16xf32>
    %318 = arith.addf %314, %317 : vector<16x16xf32>
    %319 = tpu.reciprocal %318 {approx = true} : vector<16x16xf32> -> vector<16x16xf32>
    %320 = arith.mulf %316, %319 : vector<16x16xf32>
    %cst_141 = arith.constant 2.000000e+01 : f32
    %321 = vector.broadcast %cst_141 : f32 to vector<16x16xf32>
    %322 = arith.cmpf ogt, %310, %321 : vector<16x16xf32>
    %323 = arith.mulf %310, %320 : vector<16x16xf32>
    %324 = arith.select %322, %310, %323 : vector<16x16xi1>, vector<16x16xf32>
    %c0_142 = arith.constant 0 : index
    %c3_143 = arith.constant 3 : index
    %c0_144 = arith.constant 0 : index
    %c0_145 = arith.constant 0 : index
    %325 = vector.load %arg5[%c0_142, %c3_143, %c0_144, %c0_145] : memref<1x8x16x16xf32, #tpu.memory_space<vmem>>, vector<1x1x16x16xf32>
    %326 = vector.shape_cast %325 : vector<1x1x16x16xf32> to vector<16x16xf32>
    %327 = vector.shape_cast %324 : vector<16x16xf32> to vector<1x1x16x16xf32>
    tpu.vector_store %arg5[%c0_142, %c3_143, %c0_144, %c0_145], %327 {strides = array<i32>} : memref<1x8x16x16xf32, #tpu.memory_space<vmem>>, vector<1x1x16x16xf32>,
    %c4_146 = arith.constant 4 : index
    %c0_147 = arith.constant 0 : index
    %328 = memref.load %arg2[%c4_146, %c0_147] : memref<8x4xf32, #tpu.memory_space<smem>>
    %329 = vector.broadcast %328 : f32 to vector<16x16xf32>
    %330 = arith.mulf %46, %329 : vector<16x16xf32>
    %c4_148 = arith.constant 4 : index
    %c1_149 = arith.constant 1 : index
    %331 = memref.load %arg2[%c4_148, %c1_149] : memref<8x4xf32, #tpu.memory_space<smem>>
    %332 = vector.broadcast %331 : f32 to vector<16x16xf32>
    %333 = arith.mulf %93, %332 : vector<16x16xf32>
    %334 = arith.addf %330, %333 : vector<16x16xf32>
    %c4_150 = arith.constant 4 : index
    %c2_151 = arith.constant 2 : index
    %335 = memref.load %arg2[%c4_150, %c2_151] : memref<8x4xf32, #tpu.memory_space<smem>>
    %336 = vector.broadcast %335 : f32 to vector<16x16xf32>
    %337 = arith.mulf %140, %336 : vector<16x16xf32>
    %338 = arith.addf %334, %337 : vector<16x16xf32>
    %c4_152 = arith.constant 4 : index
    %c3_153 = arith.constant 3 : index
    %339 = memref.load %arg2[%c4_152, %c3_153] : memref<8x4xf32, #tpu.memory_space<smem>>
    %340 = vector.broadcast %339 : f32 to vector<16x16xf32>
    %341 = arith.mulf %187, %340 : vector<16x16xf32>
    %342 = arith.addf %338, %341 : vector<16x16xf32>
    %c4_154 = arith.constant 4 : index
    %343 = memref.load %arg3[%c4_154] : memref<8xf32, #tpu.memory_space<smem>>
    %344 = vector.broadcast %343 : f32 to vector<16x16xf32>
    %345 = arith.addf %342, %344 : vector<16x16xf32>
    %346 = math.exp %345 : vector<16x16xf32>
    %cst_155 = arith.constant 1.000000e+00 : f32
    %347 = vector.broadcast %cst_155 : f32 to vector<16x16xf32>
    %348 = arith.addf %347, %346 : vector<16x16xf32>
    %349 = arith.mulf %348, %348 : vector<16x16xf32>
    %cst_156 = arith.constant 1.000000e+00 : f32
    %350 = vector.broadcast %cst_156 : f32 to vector<16x16xf32>
    %351 = arith.subf %349, %350 : vector<16x16xf32>
    %cst_157 = arith.constant 1.000000e+00 : f32
    %352 = vector.broadcast %cst_157 : f32 to vector<16x16xf32>
    %353 = arith.addf %349, %352 : vector<16x16xf32>
    %354 = tpu.reciprocal %353 {approx = true} : vector<16x16xf32> -> vector<16x16xf32>
    %355 = arith.mulf %351, %354 : vector<16x16xf32>
    %cst_158 = arith.constant 2.000000e+01 : f32
    %356 = vector.broadcast %cst_158 : f32 to vector<16x16xf32>
    %357 = arith.cmpf ogt, %345, %356 : vector<16x16xf32>
    %358 = arith.mulf %345, %355 : vector<16x16xf32>
    %359 = arith.select %357, %345, %358 : vector<16x16xi1>, vector<16x16xf32>
    %c0_159 = arith.constant 0 : index
    %c4_160 = arith.constant 4 : index
    %c0_161 = arith.constant 0 : index
    %c0_162 = arith.constant 0 : index
    %360 = vector.load %arg5[%c0_159, %c4_160, %c0_161, %c0_162] : memref<1x8x16x16xf32, #tpu.memory_space<vmem>>, vector<1x1x16x16xf32>
    %361 = vector.shape_cast %360 : vector<1x1x16x16xf32> to vector<16x16xf32>
    %362 = vector.shape_cast %359 : vector<16x16xf32> to vector<1x1x16x16xf32>
    tpu.vector_store %arg5[%c0_159, %c4_160, %c0_161, %c0_162], %362 {strides = array<i32>} : memref<1x8x16x16xf32, #tpu.memory_space<vmem>>, vector<1x1x16x16xf32>,
    %c5_163 = arith.constant 5 : index
    %c0_164 = arith.constant 0 : index
    %363 = memref.load %arg2[%c5_163, %c0_164] : memref<8x4xf32, #tpu.memory_space<smem>>
    %364 = vector.broadcast %363 : f32 to vector<16x16xf32>
    %365 = arith.mulf %46, %364 : vector<16x16xf32>
    %c5_165 = arith.constant 5 : index
    %c1_166 = arith.constant 1 : index
    %366 = memref.load %arg2[%c5_165, %c1_166] : memref<8x4xf32, #tpu.memory_space<smem>>
    %367 = vector.broadcast %366 : f32 to vector<16x16xf32>
    %368 = arith.mulf %93, %367 : vector<16x16xf32>
    %369 = arith.addf %365, %368 : vector<16x16xf32>
    %c5_167 = arith.constant 5 : index
    %c2_168 = arith.constant 2 : index
    %370 = memref.load %arg2[%c5_167, %c2_168] : memref<8x4xf32, #tpu.memory_space<smem>>
    %371 = vector.broadcast %370 : f32 to vector<16x16xf32>
    %372 = arith.mulf %140, %371 : vector<16x16xf32>
    %373 = arith.addf %369, %372 : vector<16x16xf32>
    %c5_169 = arith.constant 5 : index
    %c3_170 = arith.constant 3 : index
    %374 = memref.load %arg2[%c5_169, %c3_170] : memref<8x4xf32, #tpu.memory_space<smem>>
    %375 = vector.broadcast %374 : f32 to vector<16x16xf32>
    %376 = arith.mulf %187, %375 : vector<16x16xf32>
    %377 = arith.addf %373, %376 : vector<16x16xf32>
    %c5_171 = arith.constant 5 : index
    %378 = memref.load %arg3[%c5_171] : memref<8xf32, #tpu.memory_space<smem>>
    %379 = vector.broadcast %378 : f32 to vector<16x16xf32>
    %380 = arith.addf %377, %379 : vector<16x16xf32>
    %381 = math.exp %380 : vector<16x16xf32>
    %cst_172 = arith.constant 1.000000e+00 : f32
    %382 = vector.broadcast %cst_172 : f32 to vector<16x16xf32>
    %383 = arith.addf %382, %381 : vector<16x16xf32>
    %384 = arith.mulf %383, %383 : vector<16x16xf32>
    %cst_173 = arith.constant 1.000000e+00 : f32
    %385 = vector.broadcast %cst_173 : f32 to vector<16x16xf32>
    %386 = arith.subf %384, %385 : vector<16x16xf32>
    %cst_174 = arith.constant 1.000000e+00 : f32
    %387 = vector.broadcast %cst_174 : f32 to vector<16x16xf32>
    %388 = arith.addf %384, %387 : vector<16x16xf32>
    %389 = tpu.reciprocal %388 {approx = true} : vector<16x16xf32> -> vector<16x16xf32>
    %390 = arith.mulf %386, %389 : vector<16x16xf32>
    %cst_175 = arith.constant 2.000000e+01 : f32
    %391 = vector.broadcast %cst_175 : f32 to vector<16x16xf32>
    %392 = arith.cmpf ogt, %380, %391 : vector<16x16xf32>
    %393 = arith.mulf %380, %390 : vector<16x16xf32>
    %394 = arith.select %392, %380, %393 : vector<16x16xi1>, vector<16x16xf32>
    %c0_176 = arith.constant 0 : index
    %c5_177 = arith.constant 5 : index
    %c0_178 = arith.constant 0 : index
    %c0_179 = arith.constant 0 : index
    %395 = vector.load %arg5[%c0_176, %c5_177, %c0_178, %c0_179] : memref<1x8x16x16xf32, #tpu.memory_space<vmem>>, vector<1x1x16x16xf32>
    %396 = vector.shape_cast %395 : vector<1x1x16x16xf32> to vector<16x16xf32>
    %397 = vector.shape_cast %394 : vector<16x16xf32> to vector<1x1x16x16xf32>
    tpu.vector_store %arg5[%c0_176, %c5_177, %c0_178, %c0_179], %397 {strides = array<i32>} : memref<1x8x16x16xf32, #tpu.memory_space<vmem>>, vector<1x1x16x16xf32>,
    %c6_180 = arith.constant 6 : index
    %c0_181 = arith.constant 0 : index
    %398 = memref.load %arg2[%c6_180, %c0_181] : memref<8x4xf32, #tpu.memory_space<smem>>
    %399 = vector.broadcast %398 : f32 to vector<16x16xf32>
    %400 = arith.mulf %46, %399 : vector<16x16xf32>
    %c6_182 = arith.constant 6 : index
    %c1_183 = arith.constant 1 : index
    %401 = memref.load %arg2[%c6_182, %c1_183] : memref<8x4xf32, #tpu.memory_space<smem>>
    %402 = vector.broadcast %401 : f32 to vector<16x16xf32>
    %403 = arith.mulf %93, %402 : vector<16x16xf32>
    %404 = arith.addf %400, %403 : vector<16x16xf32>
    %c6_184 = arith.constant 6 : index
    %c2_185 = arith.constant 2 : index
    %405 = memref.load %arg2[%c6_184, %c2_185] : memref<8x4xf32, #tpu.memory_space<smem>>
    %406 = vector.broadcast %405 : f32 to vector<16x16xf32>
    %407 = arith.mulf %140, %406 : vector<16x16xf32>
    %408 = arith.addf %404, %407 : vector<16x16xf32>
    %c6_186 = arith.constant 6 : index
    %c3_187 = arith.constant 3 : index
    %409 = memref.load %arg2[%c6_186, %c3_187] : memref<8x4xf32, #tpu.memory_space<smem>>
    %410 = vector.broadcast %409 : f32 to vector<16x16xf32>
    %411 = arith.mulf %187, %410 : vector<16x16xf32>
    %412 = arith.addf %408, %411 : vector<16x16xf32>
    %c6_188 = arith.constant 6 : index
    %413 = memref.load %arg3[%c6_188] : memref<8xf32, #tpu.memory_space<smem>>
    %414 = vector.broadcast %413 : f32 to vector<16x16xf32>
    %415 = arith.addf %412, %414 : vector<16x16xf32>
    %416 = math.exp %415 : vector<16x16xf32>
    %cst_189 = arith.constant 1.000000e+00 : f32
    %417 = vector.broadcast %cst_189 : f32 to vector<16x16xf32>
    %418 = arith.addf %417, %416 : vector<16x16xf32>
    %419 = arith.mulf %418, %418 : vector<16x16xf32>
    %cst_190 = arith.constant 1.000000e+00 : f32
    %420 = vector.broadcast %cst_190 : f32 to vector<16x16xf32>
    %421 = arith.subf %419, %420 : vector<16x16xf32>
    %cst_191 = arith.constant 1.000000e+00 : f32
    %422 = vector.broadcast %cst_191 : f32 to vector<16x16xf32>
    %423 = arith.addf %419, %422 : vector<16x16xf32>
    %424 = tpu.reciprocal %423 {approx = true} : vector<16x16xf32> -> vector<16x16xf32>
    %425 = arith.mulf %421, %424 : vector<16x16xf32>
    %cst_192 = arith.constant 2.000000e+01 : f32
    %426 = vector.broadcast %cst_192 : f32 to vector<16x16xf32>
    %427 = arith.cmpf ogt, %415, %426 : vector<16x16xf32>
    %428 = arith.mulf %415, %425 : vector<16x16xf32>
    %429 = arith.select %427, %415, %428 : vector<16x16xi1>, vector<16x16xf32>
    %c0_193 = arith.constant 0 : index
    %c6_194 = arith.constant 6 : index
    %c0_195 = arith.constant 0 : index
    %c0_196 = arith.constant 0 : index
    %430 = vector.load %arg5[%c0_193, %c6_194, %c0_195, %c0_196] : memref<1x8x16x16xf32, #tpu.memory_space<vmem>>, vector<1x1x16x16xf32>
    %431 = vector.shape_cast %430 : vector<1x1x16x16xf32> to vector<16x16xf32>
    %432 = vector.shape_cast %429 : vector<16x16xf32> to vector<1x1x16x16xf32>
    tpu.vector_store %arg5[%c0_193, %c6_194, %c0_195, %c0_196], %432 {strides = array<i32>} : memref<1x8x16x16xf32, #tpu.memory_space<vmem>>, vector<1x1x16x16xf32>,
    %c7_197 = arith.constant 7 : index
    %c0_198 = arith.constant 0 : index
    %433 = memref.load %arg2[%c7_197, %c0_198] : memref<8x4xf32, #tpu.memory_space<smem>>
    %434 = vector.broadcast %433 : f32 to vector<16x16xf32>
    %435 = arith.mulf %46, %434 : vector<16x16xf32>
    %c7_199 = arith.constant 7 : index
    %c1_200 = arith.constant 1 : index
    %436 = memref.load %arg2[%c7_199, %c1_200] : memref<8x4xf32, #tpu.memory_space<smem>>
    %437 = vector.broadcast %436 : f32 to vector<16x16xf32>
    %438 = arith.mulf %93, %437 : vector<16x16xf32>
    %439 = arith.addf %435, %438 : vector<16x16xf32>
    %c7_201 = arith.constant 7 : index
    %c2_202 = arith.constant 2 : index
    %440 = memref.load %arg2[%c7_201, %c2_202] : memref<8x4xf32, #tpu.memory_space<smem>>
    %441 = vector.broadcast %440 : f32 to vector<16x16xf32>
    %442 = arith.mulf %140, %441 : vector<16x16xf32>
    %443 = arith.addf %439, %442 : vector<16x16xf32>
    %c7_203 = arith.constant 7 : index
    %c3_204 = arith.constant 3 : index
    %444 = memref.load %arg2[%c7_203, %c3_204] : memref<8x4xf32, #tpu.memory_space<smem>>
    %445 = vector.broadcast %444 : f32 to vector<16x16xf32>
    %446 = arith.mulf %187, %445 : vector<16x16xf32>
    %447 = arith.addf %443, %446 : vector<16x16xf32>
    %c7_205 = arith.constant 7 : index
    %448 = memref.load %arg3[%c7_205] : memref<8xf32, #tpu.memory_space<smem>>
    %449 = vector.broadcast %448 : f32 to vector<16x16xf32>
    %450 = arith.addf %447, %449 : vector<16x16xf32>
    %451 = math.exp %450 : vector<16x16xf32>
    %cst_206 = arith.constant 1.000000e+00 : f32
    %452 = vector.broadcast %cst_206 : f32 to vector<16x16xf32>
    %453 = arith.addf %452, %451 : vector<16x16xf32>
    %454 = arith.mulf %453, %453 : vector<16x16xf32>
    %cst_207 = arith.constant 1.000000e+00 : f32
    %455 = vector.broadcast %cst_207 : f32 to vector<16x16xf32>
    %456 = arith.subf %454, %455 : vector<16x16xf32>
    %cst_208 = arith.constant 1.000000e+00 : f32
    %457 = vector.broadcast %cst_208 : f32 to vector<16x16xf32>
    %458 = arith.addf %454, %457 : vector<16x16xf32>
    %459 = tpu.reciprocal %458 {approx = true} : vector<16x16xf32> -> vector<16x16xf32>
    %460 = arith.mulf %456, %459 : vector<16x16xf32>
    %cst_209 = arith.constant 2.000000e+01 : f32
    %461 = vector.broadcast %cst_209 : f32 to vector<16x16xf32>
    %462 = arith.cmpf ogt, %450, %461 : vector<16x16xf32>
    %463 = arith.mulf %450, %460 : vector<16x16xf32>
    %464 = arith.select %462, %450, %463 : vector<16x16xi1>, vector<16x16xf32>
    %c0_210 = arith.constant 0 : index
    %c7_211 = arith.constant 7 : index
    %c0_212 = arith.constant 0 : index
    %c0_213 = arith.constant 0 : index
    %465 = vector.load %arg5[%c0_210, %c7_211, %c0_212, %c0_213] : memref<1x8x16x16xf32, #tpu.memory_space<vmem>>, vector<1x1x16x16xf32>
    %466 = vector.shape_cast %465 : vector<1x1x16x16xf32> to vector<16x16xf32>
    %467 = vector.shape_cast %464 : vector<16x16xf32> to vector<1x1x16x16xf32>
    tpu.vector_store %arg5[%c0_210, %c7_211, %c0_212, %c0_213], %467 {strides = array<i32>} : memref<1x8x16x16xf32, #tpu.memory_space<vmem>>, vector<1x1x16x16xf32>,
    return
  }
  func.func @transform_0(%arg0: i32) -> (i32, i32) {
    %c0_i32 = arith.constant 0 : i32
    %c0_i32_0 = arith.constant 0 : i32
    %c0_i32_1 = arith.constant 0 : i32
    return %c0_i32, %c0_i32_0 : i32, i32
  }
  func.func @transform_1(%arg0: i32) -> (i32, i32) {
    %c0_i32 = arith.constant 0 : i32
    %c0_i32_0 = arith.constant 0 : i32
    %c0_i32_1 = arith.constant 0 : i32
    return %c0_i32, %c0_i32_0 : i32, i32
  }
  func.func @transform_2(%arg0: i32) -> i32 {
    %c0_i32 = arith.constant 0 : i32
    %c0_i32_0 = arith.constant 0 : i32
    return %c0_i32 : i32
  }
  func.func @transform_3(%arg0: i32) -> (i32, i32, i32, i32) {
    %c0_i32 = arith.constant 0 : i32
    %c0_i32_0 = arith.constant 0 : i32
    %c0_i32_1 = arith.constant 0 : i32
    %c0_i32_2 = arith.constant 0 : i32
    return %arg0, %c0_i32, %c0_i32_0, %c0_i32_1 : i32, i32, i32, i32
  }
  func.func @transform_4(%arg0: i32) -> (i32, i32, i32, i32) {
    %c0_i32 = arith.constant 0 : i32
    %c0_i32_0 = arith.constant 0 : i32
    %c0_i32_1 = arith.constant 0 : i32
    %c0_i32_2 = arith.constant 0 : i32
    return %arg0, %c0_i32, %c0_i32_0, %c0_i32_1 : i32, i32, i32, i32
  }
}

</mosaic_0001>

<llo_original>
// kernel: tpu_custom_call.1
$region0: #{tpu_custom_call.1}
  #allocation0 [shape = 'u32[]', space=smem, size = 0x4, offset = 0x4, fixed_abs, tag = 'smem constant byte address 0x4 - core index']
  #allocation1 [shape = 'u32[72,128]{1,0:T(1,128)}', space=vmem, size = 0x9000, scoped, tag = 'internal scratch']
  %s0 = inlined_call_operand.vmem [shape: f32[4,9], index: 0, kind: input, shape index: {}]
  %s1 = inlined_call_operand.vmem [shape: f32[8,4], index: 1, kind: input, shape index: {}]
  %s2 = inlined_call_operand.vmem [shape: f32[8], index: 2, kind: input, shape index: {}]
  %s3 = inlined_call_operand.vmem [shape: bf16[2,4,18,18], index: 3, kind: input, shape index: {}]
  %s4 = inlined_call_operand.hbm [shape: f32[2,8,16,16], index: 4, kind: output, shape index: {}]
  %s5 = sld [smem:[#allocation0]]
  $region61: #{tpu_custom_call.1} parent=0
    _
  %s7 = ssub.s32 1, %s5
  %s8 = scalar_select 0, %s7, %s5
  $region1: #{tpu_custom_call.1} parent=0
    #allocation2 [shape = 'u8[2048]{0}', space=smem, size = 0x800, scoped, tag = 'input window, operand 0, single buffered']
    #allocation3 [shape = 's32[2]{0}', space=sflag, size = 0x8, scoped, tag = 'scoped memory for tpu_custom_call.1']
    #allocation4 [shape = 's32[2]{0}', space=sflag, size = 0x8, scoped, tag = 'scoped memory for tpu_custom_call.1']
    #allocation5 [shape = 'u8[4096]{0}', space=smem, size = 0x1000, scoped, tag = 'input window, operand 1, single buffered']
    #allocation6 [shape = 's32[1]{0}', space=sflag, size = 0x4, scoped, tag = 'scoped memory for tpu_custom_call.1']
    #allocation7 [shape = 'u8[512]{0}', space=smem, size = 0x200, scoped, tag = 'input window, operand 2, single buffered']
    #allocation8 [shape = 'u8[131072]{0}', space=vmem, size = 0x20000, scoped, tag = 'output window, operand 0']
    %9 = vsyncpa [#allocation4], 0
    %10 = vsyncpa [#allocation6], 0
    %11 = vsyncpa [#allocation3], 0
    %s12 = scalar_lea.sflag [#allocation3], 1
    %13 = vsyncpa %s12, 0
    loop: start=0, step=1, limit=4
    $region2: #{tpu_custom_call.1} parent=1 // loop_pre_header
      _
    $region3: #{tpu_custom_call.1} parent=1 // loop_header
      %s15 = sphi 0, %s19
      %p16 = scmp.ge.s32.totalorder %s15, 4
      %s23 = sphi 0, %s23
      %s25 = sphi 0, %s23
      %s26 = sphi 0, %s25
      %s40 = sphi 0, %s26
      %s44 = sphi 0, %s44
      %s46 = sphi 0, %s44
      %s47 = sphi 0, %s46
      %s61 = sphi 0, %s47
      %s65 = sphi 0, %s65
      %s67 = sphi 0, %s65
      %s68 = sphi 0, %s67
      %s82 = sphi 0, %s68
      %s88 = sphi 0, %s90
      %s91 = sphi 0, %s88
      %s92 = sphi 0, %s91
      %s108 = sphi 0, %s92
      %s114 = sphi 0, %s116
      %s117 = sphi 0, %s114
      %s118 = sphi 0, %s117
      %s134 = sphi 0, %s118
    $region4: #{tpu_custom_call.1} parent=1 // loop_header_branch
      %18 = sbr.rel (%p16) target = $region8
    $region5: #{tpu_custom_call.1} parent=1 // loop_body
      %s20 = ssub.s32 %s15, 1
      %s21 = ssub.s32 %s15, 2
      %s22 = sadd.s32 %s15, 1
      %s24 = sadd.s32 %s23, 1
      %p27 = scmp.eq.s32.totalorder %s15, 1
      %p28 = scmp.ne.s32.totalorder %s23, %s25
      %p29 = scmp.eq.s32.totalorder %s15, 0
      %p30 = por %p28, %p29
      %p31 = scmp.ne.s32.totalorder %s23, %s25
      %p32 = scmp.eq.s32.totalorder %s20, 1
      %p33 = por %p31, %p32
      %p34 = scmp.ne.s32.totalorder %s25, %s26
      %p35 = scmp.eq.s32.totalorder %s20, 0
      %p36 = por %p34, %p35
      %p37 = scmp.ne.s32.totalorder %s25, %s26
      %p38 = scmp.eq.s32.totalorder %s21, 1
      %p39 = por %p37, %p38
      %p41 = scmp.ne.s32.totalorder %s26, %s40
      %p42 = scmp.eq.s32.totalorder %s21, 0
      %p43 = por %p41, %p42
      %s45 = sadd.s32 %s44, 1
      %p48 = scmp.eq.s32.totalorder %s15, 1
      %p49 = scmp.ne.s32.totalorder %s44, %s46
      %p50 = scmp.eq.s32.totalorder %s15, 0
      %p51 = por %p49, %p50
      %p52 = scmp.ne.s32.totalorder %s44, %s46
      %p53 = scmp.eq.s32.totalorder %s20, 1
      %p54 = por %p52, %p53
      %p55 = scmp.ne.s32.totalorder %s46, %s47
      %p56 = scmp.eq.s32.totalorder %s20, 0
      %p57 = por %p55, %p56
      %p58 = scmp.ne.s32.totalorder %s46, %s47
      %p59 = scmp.eq.s32.totalorder %s21, 1
      %p60 = por %p58, %p59
      %p62 = scmp.ne.s32.totalorder %s47, %s61
      %p63 = scmp.eq.s32.totalorder %s21, 0
      %p64 = por %p62, %p63
      %s66 = sadd.s32 %s65, 1
      %p69 = scmp.eq.s32.totalorder %s15, 1
      %p70 = scmp.ne.s32.totalorder %s65, %s67
      %p71 = scmp.eq.s32.totalorder %s15, 0
      %p72 = por %p70, %p71
      %p73 = scmp.ne.s32.totalorder %s65, %s67
      %p74 = scmp.eq.s32.totalorder %s20, 1
      %p75 = por %p73, %p74
      %p76 = scmp.ne.s32.totalorder %s67, %s68
      %p77 = scmp.eq.s32.totalorder %s20, 0
      %p78 = por %p76, %p77
      %p79 = scmp.ne.s32.totalorder %s67, %s68
      %p80 = scmp.eq.s32.totalorder %s21, 1
      %p81 = por %p79, %p80
      %p83 = scmp.ne.s32.totalorder %s68, %s82
      %p84 = scmp.eq.s32.totalorder %s21, 0
      %p85 = por %p83, %p84
      %s86 = ssub.s32 %s15, %s22
      %p87 = scmp.eq.s32.totalorder %s86, 0
      %s89 = sadd.s32 %s88, 1
      %s90 = scalar_select %p87, %s88, %s89
      %p93 = pneg %p87
      %p94 = scmp.eq.s32.totalorder %s15, 1
      %p95 = por %p93, %p94
      %p96 = scmp.ne.s32.totalorder %s88, %s91
      %p97 = scmp.eq.s32.totalorder %s15, 0
      %p98 = por %p96, %p97
      %p99 = scmp.ne.s32.totalorder %s88, %s91
      %p100 = scmp.eq.s32.totalorder %s20, 1
      %p101 = por %p99, %p100
      %p102 = scmp.ne.s32.totalorder %s91, %s92
      %p103 = scmp.eq.s32.totalorder %s20, 0
      %p104 = por %p102, %p103
      %p105 = scmp.ne.s32.totalorder %s91, %s92
      %p106 = scmp.eq.s32.totalorder %s21, 1
      %p107 = por %p105, %p106
      %p109 = scmp.ne.s32.totalorder %s92, %s108
      %p110 = scmp.eq.s32.totalorder %s21, 0
      %p111 = por %p109, %p110
      %s112 = ssub.s32 %s15, %s22
      %p113 = scmp.eq.s32.totalorder %s112, 0
      %s115 = sadd.s32 %s114, 1
      %s116 = scalar_select %p113, %s114, %s115
      %p119 = pneg %p113
      %p120 = scmp.eq.s32.totalorder %s15, 1
      %p121 = por %p119, %p120
      %p122 = scmp.ne.s32.totalorder %s114, %s117
      %p123 = scmp.eq.s32.totalorder %s15, 0
      %p124 = por %p122, %p123
      %p125 = scmp.ne.s32.totalorder %s114, %s117
      %p126 = scmp.eq.s32.totalorder %s20, 1
      %p127 = por %p125, %p126
      %p128 = scmp.ne.s32.totalorder %s117, %s118
      %p129 = scmp.eq.s32.totalorder %s20, 0
      %p130 = por %p128, %p129
      %p131 = scmp.ne.s32.totalorder %s117, %s118
      %p132 = scmp.eq.s32.totalorder %s21, 1
      %p133 = por %p131, %p132
      %p135 = scmp.ne.s32.totalorder %s118, %s134
      %p136 = scmp.eq.s32.totalorder %s21, 0
      %p137 = por %p135, %p136
      %p138 = scmp.le.s32.totalorder 1, %s15
      %p139 = scmp.lt.s32.totalorder %s15, 3
      %p140 = pnand %p138, %p139
      %p141 = pneg %p140
      // Predicated region
      $region9: #{tpu_custom_call.1} parent=5 // pred_check
        _
      $region10: #{tpu_custom_call.1} parent=5 // pred_check_branch
        %143 = sbr.rel (%p140) target = $region12
      $region11: #{tpu_custom_call.1} parent=5 // pred_region
        %s144 = ssub.s32 %s15, 1
        // Predicated region
        $region13: #{tpu_custom_call.1} parent=11 // pred_check
          %p145 = pneg %p36
        $region14: #{tpu_custom_call.1} parent=11 // pred_check_branch
          %147 = sbr.rel (%p145) target = $region16
        $region15: #{tpu_custom_call.1} parent=11 // pred_region
          %149 = vsyncadd [#allocation4], 0
          %s151 = sshll.u32 %s0, 4
          %s152 = int_to_ptr.vmem [resolvable:$true] %s151
          %154 = dma.vmem_to_smem %s152, 64, [#allocation2], [#allocation4]
        $region16: #{tpu_custom_call.1} parent=11 // pred_fallthru
          _
        // Predicated region
        $region17: #{tpu_custom_call.1} parent=11 // pred_check
          %p155 = pneg %p57
        $region18: #{tpu_custom_call.1} parent=11 // pred_check_branch
          %157 = sbr.rel (%p155) target = $region20
        $region19: #{tpu_custom_call.1} parent=11 // pred_region
          %159 = vsyncadd [#allocation6], 0
          %s161 = sshll.u32 %s1, 4
          %s162 = int_to_ptr.vmem [resolvable:$true] %s161
          %164 = dma.vmem_to_smem %s162, 128, [#allocation5], [#allocation6]
        $region20: #{tpu_custom_call.1} parent=11 // pred_fallthru
          _
        // Predicated region
        $region21: #{tpu_custom_call.1} parent=11 // pred_check
          %p165 = pneg %p78
        $region22: #{tpu_custom_call.1} parent=11 // pred_check_branch
          %167 = sbr.rel (%p165) target = $region24
        $region23: #{tpu_custom_call.1} parent=11 // pred_region
          %169 = vsyncadd [#allocation6], 0
          %s171 = sshll.u32 %s2, 4
          %s172 = int_to_ptr.vmem [resolvable:$true] %s171
          %174 = dma.vmem_to_smem %s172, 16, [#allocation7], [#allocation6]
        $region24: #{tpu_custom_call.1} parent=11 // pred_fallthru
          _
      $region12: #{tpu_custom_call.1} parent=5 // pred_fallthru
        _
      %p175 = scmp.lt.s32.totalorder %s15, 2
      // Predicated region
      $region25: #{tpu_custom_call.1} parent=5 // pred_check
        %p176 = pneg %p175
      $region26: #{tpu_custom_call.1} parent=5 // pred_check_branch
        %178 = sbr.rel (%p176) target = $region28
      $region27: #{tpu_custom_call.1} parent=5 // pred_region
        // Predicated region
        $region29: #{tpu_custom_call.1} parent=27 // pred_check
          %p179 = pneg %p98
        $region30: #{tpu_custom_call.1} parent=27 // pred_check_branch
          %181 = sbr.rel (%p179) target = $region32
        $region31: #{tpu_custom_call.1} parent=27 // pred_region
          %p182 = scmp.lt.s32.totalorder %s15, 1
          %s183 = scalar_select %p182, %s15, 1
          %s184 = smul.addr %s183, 12
          %s185 = smul.addr %s184, 4
          %s186 = scalar_lea.vmem %s3, %s185
        $region32: #{tpu_custom_call.1} parent=27 // pred_fallthru
          _
      $region28: #{tpu_custom_call.1} parent=5 // pred_fallthru
        _
      %p187 = scmp.le.s32.totalorder 1, %s15
      %p188 = scmp.lt.s32.totalorder %s15, 3
      %p189 = pnand %p187, %p188
      %p190 = pneg %p189
      // Predicated region
      $region33: #{tpu_custom_call.1} parent=5 // pred_check
        _
      $region34: #{tpu_custom_call.1} parent=5 // pred_check_branch
        %192 = sbr.rel (%p189) target = $region36
      $region35: #{tpu_custom_call.1} parent=5 // pred_region
        %s193 = ssub.s32 %s15, 1
        // Predicated region
        $region37: #{tpu_custom_call.1} parent=35 // pred_check
          %p194 = pneg %p36
        $region38: #{tpu_custom_call.1} parent=35 // pred_check_branch
          %196 = sbr.rel (%p194) target = $region40
        $region39: #{tpu_custom_call.1} parent=35 // pred_region
          %198 = dma.done [#allocation4], 64
        $region40: #{tpu_custom_call.1} parent=35 // pred_fallthru
          _
        // Predicated region
        $region41: #{tpu_custom_call.1} parent=35 // pred_check
          %p199 = pneg %p57
        $region42: #{tpu_custom_call.1} parent=35 // pred_check_branch
          %201 = sbr.rel (%p199) target = $region44
        $region43: #{tpu_custom_call.1} parent=35 // pred_region
          %203 = dma.done [#allocation6], 128
        $region44: #{tpu_custom_call.1} parent=35 // pred_fallthru
          _
        // Predicated region
        $region45: #{tpu_custom_call.1} parent=35 // pred_check
          %p204 = pneg %p78
        $region46: #{tpu_custom_call.1} parent=35 // pred_check_branch
          %206 = sbr.rel (%p204) target = $region48
        $region47: #{tpu_custom_call.1} parent=35 // pred_region
          %208 = dma.done [#allocation6], 16
        $region48: #{tpu_custom_call.1} parent=35 // pred_fallthru
          _
        %209 = sfence
        %p210 = pneg %p36
        %p211 = pneg %p33
        %p212 = pneg %p57
        %p213 = pneg %p54
        %p214 = pneg %p78
        %p215 = pneg %p75
        %p216 = scmp.lt.s32.totalorder %s20, 1
        %s217 = scalar_select %p216, %s20, 1
        %s218 = smul.addr %s217, 12
        %s219 = smul.addr %s218, 4
        %s220 = scalar_lea.vmem %s3, %s219
        %p221 = pneg %p104
        %p222 = pneg %p101
        %p223 = pneg %p130
        %p224 = pneg %p127
        %s225 = sand.u32 %s117, 1
        %s226 = scalar_lea.sflag [#allocation3], %s225
        %s227 = sand.u32 %s117, 1
        %s228 = smul.addr %s227, 128
        %s229 = scalar_lea.vmem [#allocation8], %s228
        %p230 = scmp.lt.s32.totalorder %s20, 1
        %s231 = scalar_select %p230, %s20, 1
        %s232 = smul.addr %s231, 12
        %s233 = smul.addr %s232, 4
        %s234 = scalar_lea.vmem %s3, %s233
        %v235 = vld [vmem:[%s234] sm:$0xf]
        %v236 = vld [vmem:[%s234 + $0x4] sm:$0xf]
        %v237 = vld [vmem:[%s234 + $0x8] sm:$0x1]
        %v238 = vunpack.c.l.bf16 %v235
        %v239 = vunpack.c.l.bf16 %v236
        %v240 = vunpack.c.l.bf16 %v237
        %s241 = sld [smem:[#allocation2]]
        %v242 = vstv %s241
        %v243 = vmul.f32 %v238, %v242
        %v244 = vmul.f32 %v239, %v242
        %s245 = sld [smem:[#allocation2 + $0x1]]
        %v246 = vstv %s245
        %v247 = vmul.f32 %v238, %v246
        %v248 = vmul.f32 %v239, %v246
        %251 = vrot.lane.b32.xlu0 %v247, 127
        %v252 = vpop.permute.xlu0 %251
        %253 = vrot.lane.b32.xlu0 %v248, 127
        %v254 = vpop.permute.xlu0 %253
        %v257 = vadd.f32 %v243, %v252
        %v258 = vadd.f32 %v244, %v254
        %s259 = sld [smem:[#allocation2 + $0x2]]
        %v260 = vstv %s259
        %v261 = vmul.f32 %v238, %v260
        %v262 = vmul.f32 %v239, %v260
        %265 = vrot.lane.b32.xlu0 %v261, 126
        %v266 = vpop.permute.xlu0 %265
        %267 = vrot.lane.b32.xlu0 %v262, 126
        %v268 = vpop.permute.xlu0 %267
        %v271 = vadd.f32 %v257, %v266
        %v272 = vadd.f32 %v258, %v268
        %s273 = sld [smem:[#allocation2 + $0x3]]
        %v274 = vstv %s273
        %v275 = vmul.f32 %v238, %v274
        %v276 = vmul.f32 %v239, %v274
        %v277 = vmul.f32 %v240, %v274
        %vm281 = vcmask 1046528
        %v282 = vrot.slane %v275, 1
        %v283 = vrot.slane %v276, 1
        %v284 = vsel %vm281, %v282, %v283
        %v285 = vrot.slane %v277, 1
        %v286 = vsel %vm281, %v283, %v285
        %v289 = vadd.f32 %v271, %v284
        %v290 = vadd.f32 %v272, %v286
        %s291 = sld [smem:[#allocation2 + $0x4]]
        %v292 = vstv %s291
        %v293 = vmul.f32 %v238, %v292
        %v294 = vmul.f32 %v239, %v292
        %v295 = vmul.f32 %v240, %v292
        %v299 = vrot.slane %v293, 1
        %v300 = vrot.slane %v294, 1
        %v301 = vsel %vm281, %v299, %v300
        %v302 = vrot.slane %v295, 1
        %v303 = vsel %vm281, %v300, %v302
        %304 = vrot.lane.b32.xlu0 %v301, 127
        %v305 = vpop.permute.xlu0 %304
        %306 = vrot.lane.b32.xlu0 %v303, 127
        %v307 = vpop.permute.xlu0 %306
        %v310 = vadd.f32 %v289, %v305
        %v311 = vadd.f32 %v290, %v307
        %s312 = sld [smem:[#allocation2 + $0x5]]
        %v313 = vstv %s312
        %v314 = vmul.f32 %v238, %v313
        %v315 = vmul.f32 %v239, %v313
        %v316 = vmul.f32 %v240, %v313
        %v320 = vrot.slane %v314, 1
        %v321 = vrot.slane %v315, 1
        %v322 = vsel %vm281, %v320, %v321
        %v323 = vrot.slane %v316, 1
        %v324 = vsel %vm281, %v321, %v323
        %325 = vrot.lane.b32.xlu0 %v322, 126
        %v326 = vpop.permute.xlu0 %325
        %327 = vrot.lane.b32.xlu0 %v324, 126
        %v328 = vpop.permute.xlu0 %327
        %v331 = vadd.f32 %v310, %v326
        %v332 = vadd.f32 %v311, %v328
        %s333 = sld [smem:[#allocation2 + $0x6]]
        %v334 = vstv %s333
        %v335 = vmul.f32 %v238, %v334
        %v336 = vmul.f32 %v239, %v334
        %v337 = vmul.f32 %v240, %v334
        %vm341 = vcmask 1045504
        %v342 = vrot.slane %v335, 2
        %v343 = vrot.slane %v336, 2
        %v344 = vsel %vm341, %v342, %v343
        %v345 = vrot.slane %v337, 2
        %v346 = vsel %vm341, %v343, %v345
        %v349 = vadd.f32 %v331, %v344
        %v350 = vadd.f32 %v332, %v346
        %s351 = sld [smem:[#allocation2 + $0x7]]
        %v352 = vstv %s351
        %v353 = vmul.f32 %v238, %v352
        %v354 = vmul.f32 %v239, %v352
        %v355 = vmul.f32 %v240, %v352
        %v359 = vrot.slane %v353, 2
        %v360 = vrot.slane %v354, 2
        %v361 = vsel %vm341, %v359, %v360
        %v362 = vrot.slane %v355, 2
        %v363 = vsel %vm341, %v360, %v362
        %364 = vrot.lane.b32.xlu0 %v361, 127
        %v365 = vpop.permute.xlu0 %364
        %366 = vrot.lane.b32.xlu0 %v363, 127
        %v367 = vpop.permute.xlu0 %366
        %v370 = vadd.f32 %v349, %v365
        %v371 = vadd.f32 %v350, %v367
        %s372 = sld [smem:[#allocation2 + $0x8]]
        %v373 = vstv %s372
        %v374 = vmul.f32 %v238, %v373
        %v375 = vmul.f32 %v239, %v373
        %v376 = vmul.f32 %v240, %v373
        %v380 = vrot.slane %v374, 2
        %v381 = vrot.slane %v375, 2
        %v382 = vsel %vm341, %v380, %v381
        %v383 = vrot.slane %v376, 2
        %v384 = vsel %vm341, %v381, %v383
        %385 = vrot.lane.b32.xlu0 %v382, 126
        %v386 = vpop.permute.xlu0 %385
        %387 = vrot.lane.b32.xlu0 %v384, 126
        %v388 = vpop.permute.xlu0 %387
        %v391 = vadd.f32 %v370, %v386
        %v392 = vadd.f32 %v371, %v388
        %s393 = scalar_lea.vmem %s234, 12
        %v394 = vld [vmem:[%s393] sm:$0xf]
        %v395 = vld [vmem:[%s393 + $0x4] sm:$0xf]
        %v396 = vld [vmem:[%s393 + $0x8] sm:$0x1]
        %v397 = vunpack.c.l.bf16 %v394
        %v398 = vunpack.c.l.bf16 %v395
        %v399 = vunpack.c.l.bf16 %v396
        %s400 = sld [smem:[#allocation2 + $0x80]]
        %v401 = vstv %s400
        %v402 = vmul.f32 %v397, %v401
        %v403 = vmul.f32 %v398, %v401
        %s404 = sld [smem:[#allocation2 + $0x81]]
        %v405 = vstv %s404
        %v406 = vmul.f32 %v397, %v405
        %v407 = vmul.f32 %v398, %v405
        %410 = vrot.lane.b32.xlu0 %v406, 127
        %v411 = vpop.permute.xlu0 %410
        %412 = vrot.lane.b32.xlu0 %v407, 127
        %v413 = vpop.permute.xlu0 %412
        %v416 = vadd.f32 %v402, %v411
        %v417 = vadd.f32 %v403, %v413
        %s418 = sld [smem:[#allocation2 + $0x82]]
        %v419 = vstv %s418
        %v420 = vmul.f32 %v397, %v419
        %v421 = vmul.f32 %v398, %v419
        %424 = vrot.lane.b32.xlu0 %v420, 126
        %v425 = vpop.permute.xlu0 %424
        %426 = vrot.lane.b32.xlu0 %v421, 126
        %v427 = vpop.permute.xlu0 %426
        %v430 = vadd.f32 %v416, %v425
        %v431 = vadd.f32 %v417, %v427
        %s432 = sld [smem:[#allocation2 + $0x83]]
        %v433 = vstv %s432
        %v434 = vmul.f32 %v397, %v433
        %v435 = vmul.f32 %v398, %v433
        %v436 = vmul.f32 %v399, %v433
        %v440 = vrot.slane %v434, 1
        %v441 = vrot.slane %v435, 1
        %v442 = vsel %vm281, %v440, %v441
        %v443 = vrot.slane %v436, 1
        %v444 = vsel %vm281, %v441, %v443
        %v447 = vadd.f32 %v430, %v442
        %v448 = vadd.f32 %v431, %v444
        %s449 = sld [smem:[#allocation2 + $0x84]]
        %v450 = vstv %s449
        %v451 = vmul.f32 %v397, %v450
        %v452 = vmul.f32 %v398, %v450
        %v453 = vmul.f32 %v399, %v450
        %v457 = vrot.slane %v451, 1
        %v458 = vrot.slane %v452, 1
        %v459 = vsel %vm281, %v457, %v458
        %v460 = vrot.slane %v453, 1
        %v461 = vsel %vm281, %v458, %v460
        %462 = vrot.lane.b32.xlu0 %v459, 127
        %v463 = vpop.permute.xlu0 %462
        %464 = vrot.lane.b32.xlu0 %v461, 127
        %v465 = vpop.permute.xlu0 %464
        %v468 = vadd.f32 %v447, %v463
        %v469 = vadd.f32 %v448, %v465
        %s470 = sld [smem:[#allocation2 + $0x85]]
        %v471 = vstv %s470
        %v472 = vmul.f32 %v397, %v471
        %v473 = vmul.f32 %v398, %v471
        %v474 = vmul.f32 %v399, %v471
        %v478 = vrot.slane %v472, 1
        %v479 = vrot.slane %v473, 1
        %v480 = vsel %vm281, %v478, %v479
        %v481 = vrot.slane %v474, 1
        %v482 = vsel %vm281, %v479, %v481
        %483 = vrot.lane.b32.xlu0 %v480, 126
        %v484 = vpop.permute.xlu0 %483
        %485 = vrot.lane.b32.xlu0 %v482, 126
        %v486 = vpop.permute.xlu0 %485
        %v489 = vadd.f32 %v468, %v484
        %v490 = vadd.f32 %v469, %v486
        %s491 = sld [smem:[#allocation2 + $0x86]]
        %v492 = vstv %s491
        %v493 = vmul.f32 %v397, %v492
        %v494 = vmul.f32 %v398, %v492
        %v495 = vmul.f32 %v399, %v492
        %v499 = vrot.slane %v493, 2
        %v500 = vrot.slane %v494, 2
        %v501 = vsel %vm341, %v499, %v500
        %v502 = vrot.slane %v495, 2
        %v503 = vsel %vm341, %v500, %v502
        %v506 = vadd.f32 %v489, %v501
        %v507 = vadd.f32 %v490, %v503
        %s508 = sld [smem:[#allocation2 + $0x87]]
        %v509 = vstv %s508
        %v510 = vmul.f32 %v397, %v509
        %v511 = vmul.f32 %v398, %v509
        %v512 = vmul.f32 %v399, %v509
        %v516 = vrot.slane %v510, 2
        %v517 = vrot.slane %v511, 2
        %v518 = vsel %vm341, %v516, %v517
        %v519 = vrot.slane %v512, 2
        %v520 = vsel %vm341, %v517, %v519
        %521 = vrot.lane.b32.xlu0 %v518, 127
        %v522 = vpop.permute.xlu0 %521
        %523 = vrot.lane.b32.xlu0 %v520, 127
        %v524 = vpop.permute.xlu0 %523
        %v527 = vadd.f32 %v506, %v522
        %v528 = vadd.f32 %v507, %v524
        %s529 = sld [smem:[#allocation2 + $0x88]]
        %v530 = vstv %s529
        %v531 = vmul.f32 %v397, %v530
        %v532 = vmul.f32 %v398, %v530
        %v533 = vmul.f32 %v399, %v530
        %v537 = vrot.slane %v531, 2
        %v538 = vrot.slane %v532, 2
        %v539 = vsel %vm341, %v537, %v538
        %v540 = vrot.slane %v533, 2
        %v541 = vsel %vm341, %v538, %v540
        %542 = vrot.lane.b32.xlu0 %v539, 126
        %v543 = vpop.permute.xlu0 %542
        %544 = vrot.lane.b32.xlu0 %v541, 126
        %v545 = vpop.permute.xlu0 %544
        %v548 = vadd.f32 %v527, %v543
        %v549 = vadd.f32 %v528, %v545
        %s550 = scalar_lea.vmem %s234, 24
        %v551 = vld [vmem:[%s550] sm:$0xf]
        %v552 = vld [vmem:[%s550 + $0x4] sm:$0xf]
        %v553 = vld [vmem:[%s550 + $0x8] sm:$0x1]
        %v554 = vunpack.c.l.bf16 %v551
        %v555 = vunpack.c.l.bf16 %v552
        %v556 = vunpack.c.l.bf16 %v553
        %s557 = sld [smem:[#allocation2 + $0x100]]
        %v558 = vstv %s557
        %v559 = vmul.f32 %v554, %v558
        %v560 = vmul.f32 %v555, %v558
        %s561 = sld [smem:[#allocation2 + $0x101]]
        %v562 = vstv %s561
        %v563 = vmul.f32 %v554, %v562
        %v564 = vmul.f32 %v555, %v562
        %567 = vrot.lane.b32.xlu0 %v563, 127
        %v568 = vpop.permute.xlu0 %567
        %569 = vrot.lane.b32.xlu0 %v564, 127
        %v570 = vpop.permute.xlu0 %569
        %v573 = vadd.f32 %v559, %v568
        %v574 = vadd.f32 %v560, %v570
        %s575 = sld [smem:[#allocation2 + $0x102]]
        %v576 = vstv %s575
        %v577 = vmul.f32 %v554, %v576
        %v578 = vmul.f32 %v555, %v576
        %581 = vrot.lane.b32.xlu0 %v577, 126
        %v582 = vpop.permute.xlu0 %581
        %583 = vrot.lane.b32.xlu0 %v578, 126
        %v584 = vpop.permute.xlu0 %583
        %v587 = vadd.f32 %v573, %v582
        %v588 = vadd.f32 %v574, %v584
        %s589 = sld [smem:[#allocation2 + $0x103]]
        %v590 = vstv %s589
        %v591 = vmul.f32 %v554, %v590
        %v592 = vmul.f32 %v555, %v590
        %v593 = vmul.f32 %v556, %v590
        %v597 = vrot.slane %v591, 1
        %v598 = vrot.slane %v592, 1
        %v599 = vsel %vm281, %v597, %v598
        %v600 = vrot.slane %v593, 1
        %v601 = vsel %vm281, %v598, %v600
        %v604 = vadd.f32 %v587, %v599
        %v605 = vadd.f32 %v588, %v601
        %s606 = sld [smem:[#allocation2 + $0x104]]
        %v607 = vstv %s606
        %v608 = vmul.f32 %v554, %v607
        %v609 = vmul.f32 %v555, %v607
        %v610 = vmul.f32 %v556, %v607
        %v614 = vrot.slane %v608, 1
        %v615 = vrot.slane %v609, 1
        %v616 = vsel %vm281, %v614, %v615
        %v617 = vrot.slane %v610, 1
        %v618 = vsel %vm281, %v615, %v617
        %619 = vrot.lane.b32.xlu0 %v616, 127
        %v620 = vpop.permute.xlu0 %619
        %621 = vrot.lane.b32.xlu0 %v618, 127
        %v622 = vpop.permute.xlu0 %621
        %v625 = vadd.f32 %v604, %v620
        %v626 = vadd.f32 %v605, %v622
        %s627 = sld [smem:[#allocation2 + $0x105]]
        %v628 = vstv %s627
        %v629 = vmul.f32 %v554, %v628
        %v630 = vmul.f32 %v555, %v628
        %v631 = vmul.f32 %v556, %v628
        %v635 = vrot.slane %v629, 1
        %v636 = vrot.slane %v630, 1
        %v637 = vsel %vm281, %v635, %v636
        %v638 = vrot.slane %v631, 1
        %v639 = vsel %vm281, %v636, %v638
        %640 = vrot.lane.b32.xlu0 %v637, 126
        %v641 = vpop.permute.xlu0 %640
        %642 = vrot.lane.b32.xlu0 %v639, 126
        %v643 = vpop.permute.xlu0 %642
        %v646 = vadd.f32 %v625, %v641
        %v647 = vadd.f32 %v626, %v643
        %s648 = sld [smem:[#allocation2 + $0x106]]
        %v649 = vstv %s648
        %v650 = vmul.f32 %v554, %v649
        %v651 = vmul.f32 %v555, %v649
        %v652 = vmul.f32 %v556, %v649
        %v656 = vrot.slane %v650, 2
        %v657 = vrot.slane %v651, 2
        %v658 = vsel %vm341, %v656, %v657
        %v659 = vrot.slane %v652, 2
        %v660 = vsel %vm341, %v657, %v659
        %v663 = vadd.f32 %v646, %v658
        %v664 = vadd.f32 %v647, %v660
        %s665 = sld [smem:[#allocation2 + $0x107]]
        %v666 = vstv %s665
        %v667 = vmul.f32 %v554, %v666
        %v668 = vmul.f32 %v555, %v666
        %v669 = vmul.f32 %v556, %v666
        %v673 = vrot.slane %v667, 2
        %v674 = vrot.slane %v668, 2
        %v675 = vsel %vm341, %v673, %v674
        %v676 = vrot.slane %v669, 2
        %v677 = vsel %vm341, %v674, %v676
        %678 = vrot.lane.b32.xlu0 %v675, 127
        %v679 = vpop.permute.xlu0 %678
        %680 = vrot.lane.b32.xlu0 %v677, 127
        %v681 = vpop.permute.xlu0 %680
        %v684 = vadd.f32 %v663, %v679
        %v685 = vadd.f32 %v664, %v681
        %s686 = sld [smem:[#allocation2 + $0x108]]
        %v687 = vstv %s686
        %v688 = vmul.f32 %v554, %v687
        %v689 = vmul.f32 %v555, %v687
        %v690 = vmul.f32 %v556, %v687
        %v694 = vrot.slane %v688, 2
        %v695 = vrot.slane %v689, 2
        %v696 = vsel %vm341, %v694, %v695
        %v697 = vrot.slane %v690, 2
        %v698 = vsel %vm341, %v695, %v697
        %699 = vrot.lane.b32.xlu0 %v696, 126
        %v700 = vpop.permute.xlu0 %699
        %701 = vrot.lane.b32.xlu0 %v698, 126
        %v702 = vpop.permute.xlu0 %701
        %v705 = vadd.f32 %v684, %v700
        %v706 = vadd.f32 %v685, %v702
        %s707 = scalar_lea.vmem %s234, 36
        %v708 = vld [vmem:[%s707] sm:$0xf]
        %v709 = vld [vmem:[%s707 + $0x4] sm:$0xf]
        %v710 = vld [vmem:[%s707 + $0x8] sm:$0x1]
        %v711 = vunpack.c.l.bf16 %v708
        %v712 = vunpack.c.l.bf16 %v709
        %v713 = vunpack.c.l.bf16 %v710
        %s714 = sld [smem:[#allocation2 + $0x180]]
        %v715 = vstv %s714
        %v716 = vmul.f32 %v711, %v715
        %v717 = vmul.f32 %v712, %v715
        %s718 = sld [smem:[#allocation2 + $0x181]]
        %v719 = vstv %s718
        %v720 = vmul.f32 %v711, %v719
        %v721 = vmul.f32 %v712, %v719
        %724 = vrot.lane.b32.xlu0 %v720, 127
        %v725 = vpop.permute.xlu0 %724
        %726 = vrot.lane.b32.xlu0 %v721, 127
        %v727 = vpop.permute.xlu0 %726
        %v730 = vadd.f32 %v716, %v725
        %v731 = vadd.f32 %v717, %v727
        %s732 = sld [smem:[#allocation2 + $0x182]]
        %v733 = vstv %s732
        %v734 = vmul.f32 %v711, %v733
        %v735 = vmul.f32 %v712, %v733
        %738 = vrot.lane.b32.xlu0 %v734, 126
        %v739 = vpop.permute.xlu0 %738
        %740 = vrot.lane.b32.xlu0 %v735, 126
        %v741 = vpop.permute.xlu0 %740
        %v744 = vadd.f32 %v730, %v739
        %v745 = vadd.f32 %v731, %v741
        %s746 = sld [smem:[#allocation2 + $0x183]]
        %v747 = vstv %s746
        %v748 = vmul.f32 %v711, %v747
        %v749 = vmul.f32 %v712, %v747
        %v750 = vmul.f32 %v713, %v747
        %v754 = vrot.slane %v748, 1
        %v755 = vrot.slane %v749, 1
        %v756 = vsel %vm281, %v754, %v755
        %v757 = vrot.slane %v750, 1
        %v758 = vsel %vm281, %v755, %v757
        %v761 = vadd.f32 %v744, %v756
        %v762 = vadd.f32 %v745, %v758
        %s763 = sld [smem:[#allocation2 + $0x184]]
        %v764 = vstv %s763
        %v765 = vmul.f32 %v711, %v764
        %v766 = vmul.f32 %v712, %v764
        %v767 = vmul.f32 %v713, %v764
        %v771 = vrot.slane %v765, 1
        %v772 = vrot.slane %v766, 1
        %v773 = vsel %vm281, %v771, %v772
        %v774 = vrot.slane %v767, 1
        %v775 = vsel %vm281, %v772, %v774
        %776 = vrot.lane.b32.xlu0 %v773, 127
        %v777 = vpop.permute.xlu0 %776
        %778 = vrot.lane.b32.xlu0 %v775, 127
        %v779 = vpop.permute.xlu0 %778
        %v782 = vadd.f32 %v761, %v777
        %v783 = vadd.f32 %v762, %v779
        %s784 = sld [smem:[#allocation2 + $0x185]]
        %v785 = vstv %s784
        %v786 = vmul.f32 %v711, %v785
        %v787 = vmul.f32 %v712, %v785
        %v788 = vmul.f32 %v713, %v785
        %v792 = vrot.slane %v786, 1
        %v793 = vrot.slane %v787, 1
        %v794 = vsel %vm281, %v792, %v793
        %v795 = vrot.slane %v788, 1
        %v796 = vsel %vm281, %v793, %v795
        %797 = vrot.lane.b32.xlu0 %v794, 126
        %v798 = vpop.permute.xlu0 %797
        %799 = vrot.lane.b32.xlu0 %v796, 126
        %v800 = vpop.permute.xlu0 %799
        %v803 = vadd.f32 %v782, %v798
        %v804 = vadd.f32 %v783, %v800
        %s805 = sld [smem:[#allocation2 + $0x186]]
        %v806 = vstv %s805
        %v807 = vmul.f32 %v711, %v806
        %v808 = vmul.f32 %v712, %v806
        %v809 = vmul.f32 %v713, %v806
        %v813 = vrot.slane %v807, 2
        %v814 = vrot.slane %v808, 2
        %v815 = vsel %vm341, %v813, %v814
        %v816 = vrot.slane %v809, 2
        %v817 = vsel %vm341, %v814, %v816
        %v820 = vadd.f32 %v803, %v815
        %v821 = vadd.f32 %v804, %v817
        %s822 = sld [smem:[#allocation2 + $0x187]]
        %v823 = vstv %s822
        %v824 = vmul.f32 %v711, %v823
        %v825 = vmul.f32 %v712, %v823
        %v826 = vmul.f32 %v713, %v823
        %v830 = vrot.slane %v824, 2
        %v831 = vrot.slane %v825, 2
        %v832 = vsel %vm341, %v830, %v831
        %v833 = vrot.slane %v826, 2
        %v834 = vsel %vm341, %v831, %v833
        %835 = vrot.lane.b32.xlu0 %v832, 127
        %v836 = vpop.permute.xlu0 %835
        %837 = vrot.lane.b32.xlu0 %v834, 127
        %v838 = vpop.permute.xlu0 %837
        %v841 = vadd.f32 %v820, %v836
        %v842 = vadd.f32 %v821, %v838
        %s843 = sld [smem:[#allocation2 + $0x188]]
        %v844 = vstv %s843
        %v845 = vmul.f32 %v711, %v844
        %v846 = vmul.f32 %v712, %v844
        %v847 = vmul.f32 %v713, %v844
        %v851 = vrot.slane %v845, 2
        %v852 = vrot.slane %v846, 2
        %v853 = vsel %vm341, %v851, %v852
        %v854 = vrot.slane %v847, 2
        %v855 = vsel %vm341, %v852, %v854
        %856 = vrot.lane.b32.xlu0 %v853, 126
        %v857 = vpop.permute.xlu0 %856
        %858 = vrot.lane.b32.xlu0 %v855, 126
        %v859 = vpop.permute.xlu0 %858
        %v862 = vadd.f32 %v841, %v857
        %v863 = vadd.f32 %v842, %v859
        %s864 = sld [smem:[#allocation5]]
        %v865 = vstv %s864
        %v866 = vmul.f32 %v391, %v865
        %v867 = vmul.f32 %v392, %v865
        %s868 = sld [smem:[#allocation5 + $0x1]]
        %v869 = vstv %s868
        %v870 = vmul.f32 %v548, %v869
        %v871 = vmul.f32 %v549, %v869
        %v872 = vadd.f32 %v866, %v870
        %v873 = vadd.f32 %v867, %v871
        %s874 = sld [smem:[#allocation5 + $0x2]]
        %v875 = vstv %s874
        %v876 = vmul.f32 %v705, %v875
        %v877 = vmul.f32 %v706, %v875
        %v878 = vadd.f32 %v872, %v876
        %v879 = vadd.f32 %v873, %v877
        %s880 = sld [smem:[#allocation5 + $0x3]]
        %v881 = vstv %s880
        %v882 = vmul.f32 %v862, %v881
        %v883 = vmul.f32 %v863, %v881
        %v884 = vadd.f32 %v878, %v882
        %v885 = vadd.f32 %v879, %v883
        %s886 = sld [smem:[#allocation7]]
        %v887 = vstv %s886
        %v888 = vadd.f32 %v884, %v887
        %v889 = vadd.f32 %v885, %v887
        %v890 = vmul.f32 %v888, 1.442695
        %v891 = vpow.pop %v890
        %v892 = vmul.f32 %v889, 1.442695
        %v893 = vpow.pop %v892
        %v894 = vadd.f32 %v891, 1.0
        %v895 = vadd.f32 %v893, 1.0
        %v896 = vmul.f32 %v894, %v894
        %v897 = vmul.f32 %v895, %v895
        %v898 = vsub.f32 %v896, 1.0
        %v899 = vsub.f32 %v897, 1.0
        %v900 = vadd.f32 %v896, 1.0
        %v901 = vadd.f32 %v897, 1.0
        %v902 = vrcp.pop %v900
        %v903 = vrcp.pop %v901
        %v904 = vmul.f32 %v898, %v902
        %v905 = vmul.f32 %v899, %v903
        %vm906 = vcmp.gt.f32.partialorder %v888, 20.0
        %vm907 = vcmp.gt.f32.partialorder %v889, 20.0
        %v908 = vmul.f32 %v888, %v904
        %v909 = vmul.f32 %v889, %v905
        %v910 = vsel %vm906, %v888, %v908
        %v911 = vsel %vm907, %v889, %v909
        %vm912 = vcmask 130048
        %913 = vst.msk [vmem:[%s229] sm:$0xff] %vm912, %v910
        %914 = vst.msk [vmem:[%s229 + $0x8] sm:$0xff] %vm912, %v911
        %s915 = sld [smem:[#allocation5 + $0x80]]
        %v916 = vstv %s915
        %v917 = vmul.f32 %v391, %v916
        %v918 = vmul.f32 %v392, %v916
        %s919 = sld [smem:[#allocation5 + $0x81]]
        %v920 = vstv %s919
        %v921 = vmul.f32 %v548, %v920
        %v922 = vmul.f32 %v549, %v920
        %v923 = vadd.f32 %v917, %v921
        %v924 = vadd.f32 %v918, %v922
        %s925 = sld [smem:[#allocation5 + $0x82]]
        %v926 = vstv %s925
        %v927 = vmul.f32 %v705, %v926
        %v928 = vmul.f32 %v706, %v926
        %v929 = vadd.f32 %v923, %v927
        %v930 = vadd.f32 %v924, %v928
        %s931 = sld [smem:[#allocation5 + $0x83]]
        %v932 = vstv %s931
        %v933 = vmul.f32 %v862, %v932
        %v934 = vmul.f32 %v863, %v932
        %v935 = vadd.f32 %v929, %v933
        %v936 = vadd.f32 %v930, %v934
        %s937 = sld [smem:[#allocation7 + $0x1]]
        %v938 = vstv %s937
        %v939 = vadd.f32 %v935, %v938
        %v940 = vadd.f32 %v936, %v938
        %v941 = vmul.f32 %v939, 1.442695
        %v942 = vpow.pop %v941
        %v943 = vmul.f32 %v940, 1.442695
        %v944 = vpow.pop %v943
        %v945 = vadd.f32 %v942, 1.0
        %v946 = vadd.f32 %v944, 1.0
        %v947 = vmul.f32 %v945, %v945
        %v948 = vmul.f32 %v946, %v946
        %v949 = vsub.f32 %v947, 1.0
        %v950 = vsub.f32 %v948, 1.0
        %v951 = vadd.f32 %v947, 1.0
        %v952 = vadd.f32 %v948, 1.0
        %v953 = vrcp.pop %v951
        %v954 = vrcp.pop %v952
        %v955 = vmul.f32 %v949, %v953
        %v956 = vmul.f32 %v950, %v954
        %vm957 = vcmp.gt.f32.partialorder %v939, 20.0
        %vm958 = vcmp.gt.f32.partialorder %v940, 20.0
        %v959 = vmul.f32 %v939, %v955
        %v960 = vmul.f32 %v940, %v956
        %v961 = vsel %vm957, %v939, %v959
        %v962 = vsel %vm958, %v940, %v960
        %s963 = scalar_lea.vmem %s229, 16 [#allocation8]
        %964 = vst.msk [vmem:[%s963] sm:$0xff] %vm912, %v961
        %965 = vst.msk [vmem:[%s963 + $0x8] sm:$0xff] %vm912, %v962
        %s966 = sld [smem:[#allocation5 + $0x100]]
        %v967 = vstv %s966
        %v968 = vmul.f32 %v391, %v967
        %v969 = vmul.f32 %v392, %v967
        %s970 = sld [smem:[#allocation5 + $0x101]]
        %v971 = vstv %s970
        %v972 = vmul.f32 %v548, %v971
        %v973 = vmul.f32 %v549, %v971
        %v974 = vadd.f32 %v968, %v972
        %v975 = vadd.f32 %v969, %v973
        %s976 = sld [smem:[#allocation5 + $0x102]]
        %v977 = vstv %s976
        %v978 = vmul.f32 %v705, %v977
        %v979 = vmul.f32 %v706, %v977
        %v980 = vadd.f32 %v974, %v978
        %v981 = vadd.f32 %v975, %v979
        %s982 = sld [smem:[#allocation5 + $0x103]]
        %v983 = vstv %s982
        %v984 = vmul.f32 %v862, %v983
        %v985 = vmul.f32 %v863, %v983
        %v986 = vadd.f32 %v980, %v984
        %v987 = vadd.f32 %v981, %v985
        %s988 = sld [smem:[#allocation7 + $0x2]]
        %v989 = vstv %s988
        %v990 = vadd.f32 %v986, %v989
        %v991 = vadd.f32 %v987, %v989
        %v992 = vmul.f32 %v990, 1.442695
        %v993 = vpow.pop %v992
        %v994 = vmul.f32 %v991, 1.442695
        %v995 = vpow.pop %v994
        %v996 = vadd.f32 %v993, 1.0
        %v997 = vadd.f32 %v995, 1.0
        %v998 = vmul.f32 %v996, %v996
        %v999 = vmul.f32 %v997, %v997
        %v1000 = vsub.f32 %v998, 1.0
        %v1001 = vsub.f32 %v999, 1.0
        %v1002 = vadd.f32 %v998, 1.0
        %v1003 = vadd.f32 %v999, 1.0
        %v1004 = vrcp.pop %v1002
        %v1005 = vrcp.pop %v1003
        %v1006 = vmul.f32 %v1000, %v1004
        %v1007 = vmul.f32 %v1001, %v1005
        %vm1008 = vcmp.gt.f32.partialorder %v990, 20.0
        %vm1009 = vcmp.gt.f32.partialorder %v991, 20.0
        %v1010 = vmul.f32 %v990, %v1006
        %v1011 = vmul.f32 %v991, %v1007
        %v1012 = vsel %vm1008, %v990, %v1010
        %v1013 = vsel %vm1009, %v991, %v1011
        %s1014 = scalar_lea.vmem %s229, 32 [#allocation8]
        %1015 = vst.msk [vmem:[%s1014] sm:$0xff] %vm912, %v1012
        %1016 = vst.msk [vmem:[%s1014 + $0x8] sm:$0xff] %vm912, %v1013
        %s1017 = sld [smem:[#allocation5 + $0x180]]
        %v1018 = vstv %s1017
        %v1019 = vmul.f32 %v391, %v1018
        %v1020 = vmul.f32 %v392, %v1018
        %s1021 = sld [smem:[#allocation5 + $0x181]]
        %v1022 = vstv %s1021
        %v1023 = vmul.f32 %v548, %v1022
        %v1024 = vmul.f32 %v549, %v1022
        %v1025 = vadd.f32 %v1019, %v1023
        %v1026 = vadd.f32 %v1020, %v1024
        %s1027 = sld [smem:[#allocation5 + $0x182]]
        %v1028 = vstv %s1027
        %v1029 = vmul.f32 %v705, %v1028
        %v1030 = vmul.f32 %v706, %v1028
        %v1031 = vadd.f32 %v1025, %v1029
        %v1032 = vadd.f32 %v1026, %v1030
        %s1033 = sld [smem:[#allocation5 + $0x183]]
        %v1034 = vstv %s1033
        %v1035 = vmul.f32 %v862, %v1034
        %v1036 = vmul.f32 %v863, %v1034
        %v1037 = vadd.f32 %v1031, %v1035
        %v1038 = vadd.f32 %v1032, %v1036
        %s1039 = sld [smem:[#allocation7 + $0x3]]
        %v1040 = vstv %s1039
        %v1041 = vadd.f32 %v1037, %v1040
        %v1042 = vadd.f32 %v1038, %v1040
        %v1043 = vmul.f32 %v1041, 1.442695
        %v1044 = vpow.pop %v1043
        %v1045 = vmul.f32 %v1042, 1.442695
        %v1046 = vpow.pop %v1045
        %v1047 = vadd.f32 %v1044, 1.0
        %v1048 = vadd.f32 %v1046, 1.0
        %v1049 = vmul.f32 %v1047, %v1047
        %v1050 = vmul.f32 %v1048, %v1048
        %v1051 = vsub.f32 %v1049, 1.0
        %v1052 = vsub.f32 %v1050, 1.0
        %v1053 = vadd.f32 %v1049, 1.0
        %v1054 = vadd.f32 %v1050, 1.0
        %v1055 = vrcp.pop %v1053
        %v1056 = vrcp.pop %v1054
        %v1057 = vmul.f32 %v1051, %v1055
        %v1058 = vmul.f32 %v1052, %v1056
        %vm1059 = vcmp.gt.f32.partialorder %v1041, 20.0
        %vm1060 = vcmp.gt.f32.partialorder %v1042, 20.0
        %v1061 = vmul.f32 %v1041, %v1057
        %v1062 = vmul.f32 %v1042, %v1058
        %v1063 = vsel %vm1059, %v1041, %v1061
        %v1064 = vsel %vm1060, %v1042, %v1062
        %s1065 = scalar_lea.vmem %s229, 48 [#allocation8]
        %1066 = vst.msk [vmem:[%s1065] sm:$0xff] %vm912, %v1063
        %1067 = vst.msk [vmem:[%s1065 + $0x8] sm:$0xff] %vm912, %v1064
        %s1068 = sld [smem:[#allocation5 + $0x200]]
        %v1069 = vstv %s1068
        %v1070 = vmul.f32 %v391, %v1069
        %v1071 = vmul.f32 %v392, %v1069
        %s1072 = sld [smem:[#allocation5 + $0x201]]
        %v1073 = vstv %s1072
        %v1074 = vmul.f32 %v548, %v1073
        %v1075 = vmul.f32 %v549, %v1073
        %v1076 = vadd.f32 %v1070, %v1074
        %v1077 = vadd.f32 %v1071, %v1075
        %s1078 = sld [smem:[#allocation5 + $0x202]]
        %v1079 = vstv %s1078
        %v1080 = vmul.f32 %v705, %v1079
        %v1081 = vmul.f32 %v706, %v1079
        %v1082 = vadd.f32 %v1076, %v1080
        %v1083 = vadd.f32 %v1077, %v1081
        %s1084 = sld [smem:[#allocation5 + $0x203]]
        %v1085 = vstv %s1084
        %v1086 = vmul.f32 %v862, %v1085
        %v1087 = vmul.f32 %v863, %v1085
        %v1088 = vadd.f32 %v1082, %v1086
        %v1089 = vadd.f32 %v1083, %v1087
        %s1090 = sld [smem:[#allocation7 + $0x4]]
        %v1091 = vstv %s1090
        %v1092 = vadd.f32 %v1088, %v1091
        %v1093 = vadd.f32 %v1089, %v1091
        %v1094 = vmul.f32 %v1092, 1.442695
        %v1095 = vpow.pop %v1094
        %v1096 = vmul.f32 %v1093, 1.442695
        %v1097 = vpow.pop %v1096
        %v1098 = vadd.f32 %v1095, 1.0
        %v1099 = vadd.f32 %v1097, 1.0
        %v1100 = vmul.f32 %v1098, %v1098
        %v1101 = vmul.f32 %v1099, %v1099
        %v1102 = vsub.f32 %v1100, 1.0
        %v1103 = vsub.f32 %v1101, 1.0
        %v1104 = vadd.f32 %v1100, 1.0
        %v1105 = vadd.f32 %v1101, 1.0
        %v1106 = vrcp.pop %v1104
        %v1107 = vrcp.pop %v1105
        %v1108 = vmul.f32 %v1102, %v1106
        %v1109 = vmul.f32 %v1103, %v1107
        %vm1110 = vcmp.gt.f32.partialorder %v1092, 20.0
        %vm1111 = vcmp.gt.f32.partialorder %v1093, 20.0
        %v1112 = vmul.f32 %v1092, %v1108
        %v1113 = vmul.f32 %v1093, %v1109
        %v1114 = vsel %vm1110, %v1092, %v1112
        %v1115 = vsel %vm1111, %v1093, %v1113
        %s1116 = scalar_lea.vmem %s229, 64 [#allocation8]
        %1117 = vst.msk [vmem:[%s1116] sm:$0xff] %vm912, %v1114
        %1118 = vst.msk [vmem:[%s1116 + $0x8] sm:$0xff] %vm912, %v1115
        %s1119 = sld [smem:[#allocation5 + $0x280]]
        %v1120 = vstv %s1119
        %v1121 = vmul.f32 %v391, %v1120
        %v1122 = vmul.f32 %v392, %v1120
        %s1123 = sld [smem:[#allocation5 + $0x281]]
        %v1124 = vstv %s1123
        %v1125 = vmul.f32 %v548, %v1124
        %v1126 = vmul.f32 %v549, %v1124
        %v1127 = vadd.f32 %v1121, %v1125
        %v1128 = vadd.f32 %v1122, %v1126
        %s1129 = sld [smem:[#allocation5 + $0x282]]
        %v1130 = vstv %s1129
        %v1131 = vmul.f32 %v705, %v1130
        %v1132 = vmul.f32 %v706, %v1130
        %v1133 = vadd.f32 %v1127, %v1131
        %v1134 = vadd.f32 %v1128, %v1132
        %s1135 = sld [smem:[#allocation5 + $0x283]]
        %v1136 = vstv %s1135
        %v1137 = vmul.f32 %v862, %v1136
        %v1138 = vmul.f32 %v863, %v1136
        %v1139 = vadd.f32 %v1133, %v1137
        %v1140 = vadd.f32 %v1134, %v1138
        %s1141 = sld [smem:[#allocation7 + $0x5]]
        %v1142 = vstv %s1141
        %v1143 = vadd.f32 %v1139, %v1142
        %v1144 = vadd.f32 %v1140, %v1142
        %v1145 = vmul.f32 %v1143, 1.442695
        %v1146 = vpow.pop %v1145
        %v1147 = vmul.f32 %v1144, 1.442695
        %v1148 = vpow.pop %v1147
        %v1149 = vadd.f32 %v1146, 1.0
        %v1150 = vadd.f32 %v1148, 1.0
        %v1151 = vmul.f32 %v1149, %v1149
        %v1152 = vmul.f32 %v1150, %v1150
        %v1153 = vsub.f32 %v1151, 1.0
        %v1154 = vsub.f32 %v1152, 1.0
        %v1155 = vadd.f32 %v1151, 1.0
        %v1156 = vadd.f32 %v1152, 1.0
        %v1157 = vrcp.pop %v1155
        %v1158 = vrcp.pop %v1156
        %v1159 = vmul.f32 %v1153, %v1157
        %v1160 = vmul.f32 %v1154, %v1158
        %vm1161 = vcmp.gt.f32.partialorder %v1143, 20.0
        %vm1162 = vcmp.gt.f32.partialorder %v1144, 20.0
        %v1163 = vmul.f32 %v1143, %v1159
        %v1164 = vmul.f32 %v1144, %v1160
        %v1165 = vsel %vm1161, %v1143, %v1163
        %v1166 = vsel %vm1162, %v1144, %v1164
        %s1167 = scalar_lea.vmem %s229, 80 [#allocation8]
        %1168 = vst.msk [vmem:[%s1167] sm:$0xff] %vm912, %v1165
        %1169 = vst.msk [vmem:[%s1167 + $0x8] sm:$0xff] %vm912, %v1166
        %s1170 = sld [smem:[#allocation5 + $0x300]]
        %v1171 = vstv %s1170
        %v1172 = vmul.f32 %v391, %v1171
        %v1173 = vmul.f32 %v392, %v1171
        %s1174 = sld [smem:[#allocation5 + $0x301]]
        %v1175 = vstv %s1174
        %v1176 = vmul.f32 %v548, %v1175
        %v1177 = vmul.f32 %v549, %v1175
        %v1178 = vadd.f32 %v1172, %v1176
        %v1179 = vadd.f32 %v1173, %v1177
        %s1180 = sld [smem:[#allocation5 + $0x302]]
        %v1181 = vstv %s1180
        %v1182 = vmul.f32 %v705, %v1181
        %v1183 = vmul.f32 %v706, %v1181
        %v1184 = vadd.f32 %v1178, %v1182
        %v1185 = vadd.f32 %v1179, %v1183
        %s1186 = sld [smem:[#allocation5 + $0x303]]
        %v1187 = vstv %s1186
        %v1188 = vmul.f32 %v862, %v1187
        %v1189 = vmul.f32 %v863, %v1187
        %v1190 = vadd.f32 %v1184, %v1188
        %v1191 = vadd.f32 %v1185, %v1189
        %s1192 = sld [smem:[#allocation7 + $0x6]]
        %v1193 = vstv %s1192
        %v1194 = vadd.f32 %v1190, %v1193
        %v1195 = vadd.f32 %v1191, %v1193
        %v1196 = vmul.f32 %v1194, 1.442695
        %v1197 = vpow.pop %v1196
        %v1198 = vmul.f32 %v1195, 1.442695
        %v1199 = vpow.pop %v1198
        %v1200 = vadd.f32 %v1197, 1.0
        %v1201 = vadd.f32 %v1199, 1.0
        %v1202 = vmul.f32 %v1200, %v1200
        %v1203 = vmul.f32 %v1201, %v1201
        %v1204 = vsub.f32 %v1202, 1.0
        %v1205 = vsub.f32 %v1203, 1.0
        %v1206 = vadd.f32 %v1202, 1.0
        %v1207 = vadd.f32 %v1203, 1.0
        %v1208 = vrcp.pop %v1206
        %v1209 = vrcp.pop %v1207
        %v1210 = vmul.f32 %v1204, %v1208
        %v1211 = vmul.f32 %v1205, %v1209
        %vm1212 = vcmp.gt.f32.partialorder %v1194, 20.0
        %vm1213 = vcmp.gt.f32.partialorder %v1195, 20.0
        %v1214 = vmul.f32 %v1194, %v1210
        %v1215 = vmul.f32 %v1195, %v1211
        %v1216 = vsel %vm1212, %v1194, %v1214
        %v1217 = vsel %vm1213, %v1195, %v1215
        %s1218 = scalar_lea.vmem %s229, 96 [#allocation8]
        %1219 = vst.msk [vmem:[%s1218] sm:$0xff] %vm912, %v1216
        %1220 = vst.msk [vmem:[%s1218 + $0x8] sm:$0xff] %vm912, %v1217
        %s1221 = sld [smem:[#allocation5 + $0x380]]
        %v1222 = vstv %s1221
        %v1223 = vmul.f32 %v391, %v1222
        %v1224 = vmul.f32 %v392, %v1222
        %s1225 = sld [smem:[#allocation5 + $0x381]]
        %v1226 = vstv %s1225
        %v1227 = vmul.f32 %v548, %v1226
        %v1228 = vmul.f32 %v549, %v1226
        %v1229 = vadd.f32 %v1223, %v1227
        %v1230 = vadd.f32 %v1224, %v1228
        %s1231 = sld [smem:[#allocation5 + $0x382]]
        %v1232 = vstv %s1231
        %v1233 = vmul.f32 %v705, %v1232
        %v1234 = vmul.f32 %v706, %v1232
        %v1235 = vadd.f32 %v1229, %v1233
        %v1236 = vadd.f32 %v1230, %v1234
        %s1237 = sld [smem:[#allocation5 + $0x383]]
        %v1238 = vstv %s1237
        %v1239 = vmul.f32 %v862, %v1238
        %v1240 = vmul.f32 %v863, %v1238
        %v1241 = vadd.f32 %v1235, %v1239
        %v1242 = vadd.f32 %v1236, %v1240
        %s1243 = sld [smem:[#allocation7 + $0x7]]
        %v1244 = vstv %s1243
        %v1245 = vadd.f32 %v1241, %v1244
        %v1246 = vadd.f32 %v1242, %v1244
        %v1247 = vmul.f32 %v1245, 1.442695
        %v1248 = vpow.pop %v1247
        %v1249 = vmul.f32 %v1246, 1.442695
        %v1250 = vpow.pop %v1249
        %v1251 = vadd.f32 %v1248, 1.0
        %v1252 = vadd.f32 %v1250, 1.0
        %v1253 = vmul.f32 %v1251, %v1251
        %v1254 = vmul.f32 %v1252, %v1252
        %v1255 = vsub.f32 %v1253, 1.0
        %v1256 = vsub.f32 %v1254, 1.0
        %v1257 = vadd.f32 %v1253, 1.0
        %v1258 = vadd.f32 %v1254, 1.0
        %v1259 = vrcp.pop %v1257
        %v1260 = vrcp.pop %v1258
        %v1261 = vmul.f32 %v1255, %v1259
        %v1262 = vmul.f32 %v1256, %v1260
        %vm1263 = vcmp.gt.f32.partialorder %v1245, 20.0
        %vm1264 = vcmp.gt.f32.partialorder %v1246, 20.0
        %v1265 = vmul.f32 %v1245, %v1261
        %v1266 = vmul.f32 %v1246, %v1262
        %v1267 = vsel %vm1263, %v1245, %v1265
        %v1268 = vsel %vm1264, %v1246, %v1266
        %s1269 = scalar_lea.vmem %s229, 112 [#allocation8]
        %1270 = vst.msk [vmem:[%s1269] sm:$0xff] %vm912, %v1267
        %1271 = vst.msk [vmem:[%s1269 + $0x8] sm:$0xff] %vm912, %v1268
        %s1272 = sand.u32 %s117, 1
        %s1273 = scalar_lea.sflag [#allocation3], %s1272
        %s1274 = sand.u32 %s117, 1
        %s1275 = smul.addr %s1274, 128
        %s1276 = scalar_lea.vmem [#allocation8], %s1275
        // Predicated region
        $region49: #{tpu_custom_call.1} parent=35 // pred_check
          %p1277 = pneg %p127
        $region50: #{tpu_custom_call.1} parent=35 // pred_check_branch
          %1279 = sbr.rel (%p1277) target = $region52
        $region51: #{tpu_custom_call.1} parent=35 // pred_region
          %1281 = vsyncadd %s1273, 0
          %s1282 = smul.addr %s20, 16
          %s1283 = smul.addr %s1282, 8
          %s1284 = scalar_lea.hbm %s4, %s1283
          %s1285 = sshll.u32 %s1276, 4
          %s1286 = int_to_ptr.vmem [resolvable:$true] %s1285
          %s1287 = sshll.u32 %s1284, 4
          %s1288 = int_to_ptr.hbm [resolvable:$true] %s1287
          %1293 = dma.vmem_to_hbm [thread:$0]  %s1286, 2048, %s1288, %s1273, 128, 128, 8
        $region52: #{tpu_custom_call.1} parent=35 // pred_fallthru
          _
      $region36: #{tpu_custom_call.1} parent=5 // pred_fallthru
        _
      %p1294 = scmp.le.s32.totalorder 2, %s15
      // Predicated region
      $region53: #{tpu_custom_call.1} parent=5 // pred_check
        %p1295 = pneg %p1294
      $region54: #{tpu_custom_call.1} parent=5 // pred_check_branch
        %1297 = sbr.rel (%p1295) target = $region56
      $region55: #{tpu_custom_call.1} parent=5 // pred_region
        %s1298 = ssub.s32 %s15, 2
        // Predicated region
        $region57: #{tpu_custom_call.1} parent=55 // pred_check
          %p1299 = pneg %p133
        $region58: #{tpu_custom_call.1} parent=55 // pred_check_branch
          %1301 = sbr.rel (%p1299) target = $region60
        $region59: #{tpu_custom_call.1} parent=55 // pred_region
          %s1302 = sand.u32 %s118, 1
          %s1303 = scalar_lea.sflag [#allocation3], %s1302
          %s1304 = sand.u32 %s118, 1
          %s1305 = smul.addr %s1304, 128
          %s1306 = scalar_lea.vmem [#allocation8], %s1305
          %1308 = dma.done %s1303, 2048
        $region60: #{tpu_custom_call.1} parent=55 // pred_fallthru
          _
      $region56: #{tpu_custom_call.1} parent=5 // pred_fallthru
        _
    $region6: #{tpu_custom_call.1} parent=1 // loop_footer
      %s19 = sadd.s32 1, %s15
    $region7: #{tpu_custom_call.1} parent=1 // loop_footer_branch
      %14 = sbr.rel target = $region3
    $region8: #{tpu_custom_call.1} parent=1 // loop_exit
      _
    %1309 = vsyncpa [#allocation3], 1
    %s1310 = scalar_lea.sflag [#allocation3], 1
    %1311 = vsyncpa %s1310, 1
    %1312 = vsyncpa [#allocation4], 1
    %s1313 = scalar_lea.sflag [#allocation4], 1
    %1314 = vsyncpa %s1313, 1
    %1315 = vsyncpa [#allocation6], 1

</llo_original>
